<compile_context>
chip_gen: v7x
topology: tpu7x:2x2x1
jax: 0.10.0
libtpu: 0.0.40
codegen_flags: <defaults>
</compile_context>

<pallas_src>
import functools

import jax
import jax.numpy as jnp
from jax.experimental import pallas as pl
from jax.experimental.pallas import tpu as pltpu

BN_EPS = 1e-5
HIDDEN = 128     # hidden_dim hard-coded inside ChannelWiseAttention
NPTS = 1024      # Conv1d(1024, hidden_dim, 1) forces the number of points


# ----------------------------------------------------------------------------
# Fused ChannelWiseAttention kernel: one grid step handles `bt` batch elements.
# x_ref / o_ref are lane-dense (bt*C, N) slabs.
# ----------------------------------------------------------------------------
def _chan_attn_kernel(x_ref, wqk_ref, wv_ref, alpha_ref, o_ref, *, hidden, bt, chans):
    x_f32 = x_ref[...]                               # (bt*C, N) f32
    x_bf = x_f32.astype(jnp.bfloat16)
    wqk = wqk_ref[...]                               # (N, 2H) bf16, resident
    wv = wv_ref[...]                                 # (C, C)  bf16, resident
    alpha = alpha_ref[0]                             # f32 scalar from SMEM

    # Stacked Q/K projection for every (batch, channel) row in ONE MXU call:
    # (bt*C, N) @ (N, 2H) -> (bt*C, 2H), bf16 operands, f32 accumulation.
    qk = jnp.dot(x_bf, wqk, preferred_element_type=jnp.float32)
    qk = jnp.maximum(qk, 0.0)                        # folded BN + ReLU

    # Per-batch attention (bt is a small compile-time constant -> unrolled).
    for b in range(bt):
        lo = b * chans
        qkb = qk[lo:lo + chans]                      # (C, 2H)
        qT = qkb[:, :hidden]                         # qT[c,h] = queries[h,c]
        kT = qkb[:, hidden:]                         # kT[c,h] = keys[c,h]

        # scores[i,j] = sum_h keys[i,h] * queries[h,j]          -> (C, C)
        scores = jax.lax.dot_general(
            kT, qT, (((1,), (1,)), ((), ())),
            preferred_element_type=jnp.float32)

        # softmax(rowmax - scores) == softmax(-scores); stabilize with row min.
        m = jnp.min(scores, axis=-1, keepdims=True)
        e = jnp.exp(m - scores)
        denom = jnp.sum(e, axis=-1, keepdims=True)
        attn = e * pl.reciprocal(denom, approx=True)             # EUP recip

        # Fold alpha into the small (C,C) map; both big dots run in bf16.
        attn_b = (alpha * attn).astype(jnp.bfloat16)

        xb_bf = x_bf[lo:lo + chans]                  # (C, N) bf16
        v = jnp.dot(wv, xb_bf, preferred_element_type=jnp.float32)   # (C, N)
        v = jnp.maximum(v, 0.0).astype(jnp.bfloat16)

        # attended = attn @ values  (== torch.bmm(attention_weights, values))
        attended = jnp.dot(attn_b, v, preferred_element_type=jnp.float32)

        # Lane-dense (C, N) store; residual uses the un-quantized f32 x.
        o_ref[lo:lo + chans, :] = attended + x_f32[lo:lo + chans]


def _pick_bt(B, C, target_rows=256):
    """Batch elements per grid step: fill the MXU M-dim, keep (bt*C) % 8 == 0."""
    bt = None
    for cand in range(1, B + 1):
        if B % cand == 0 and (cand * C) % 8 == 0 and cand * C <= target_rows:
            bt = cand
    if bt is None:
        bt = B            # full-array block is always a legal block shape
    return bt


def _vmem_limit_bytes(rows, C, N, H):
    io_bytes = 2 * 2 * rows * N * 4                       # x + out, double-buffered f32
    w_bytes = 2 * (N * 2 * H * 2 + C * C * 2)             # bf16 weights, double-buffered
    tmp_bytes = rows * 2 * H * 4 + 4 * C * C * 4 + 3 * C * N * 4
    need = io_bytes + w_bytes + tmp_bytes + (2 << 20)
    return int(min(64 << 20, max(need, 32 << 20)))        # 64 MiB cap is v7x-safe


def channel_wise_attention(x, wqk, wv, alpha):
    """x: (B, C, N) channels-first (PyTorch layout). Returns (B, C, N)."""
    B, C, N = x.shape
    assert wqk.shape == (N, 2 * HIDDEN), "wqk must be (N, 2H); N must be 1024"
    assert wv.shape == (C, C)

    bt = _pick_bt(B, C)
    rows = bt * C
    x2 = x.reshape(B * C, N)                 # free row-major collapse outside the kernel

    out2 = pl.pallas_call(
        functools.partial(_chan_attn_kernel, hidden=HIDDEN, bt=bt, chans=C),
        out_shape=jax.ShapeDtypeStruct((B * C, N), jnp.float32),
        grid_spec=pltpu.PrefetchScalarGridSpec(
            num_scalar_prefetch=0,
            grid=(B // bt,),
            in_specs=[
                pl.BlockSpec((rows, N), lambda i: (i, 0)),            # x slab
                pl.BlockSpec((N, 2 * HIDDEN), lambda i: (0, 0)),      # resident wqk (bf16)
                pl.BlockSpec((C, C), lambda i: (0, 0)),               # resident wv  (bf16)
                pl.BlockSpec(memory_space=pltpu.MemorySpace.SMEM),    # alpha scalar
            ],
            out_specs=pl.BlockSpec((rows, N), lambda i: (i, 0))),
        compiler_params=pltpu.CompilerParams(
            dimension_semantics=("parallel",),
            vmem_limit_bytes=_vmem_limit_bytes(rows, C, N, HIDDEN)),
    )(x2, wqk, wv, alpha)
    return out2.reshape(B, C, N)


# ----------------------------------------------------------------------------
# Parameter construction (BN folded; Wq/Wk stacked, pre-transposed, bf16; Wv bf16).
# ----------------------------------------------------------------------------
def make_params(key, in_dim, N=NPTS, H=HIDDEN):
    bn_scale = 1.0 / jnp.sqrt(1.0 + BN_EPS)    # eval-mode BN with fresh stats
    kq, kk, kv = jax.random.split(key, 3)
    wq = jax.random.normal(kq, (H, N), jnp.float32) * 0.02
    wk = jax.random.normal(kk, (H, N), jnp.float32) * 0.02
    wv = jax.random.normal(kv, (in_dim, in_dim), jnp.float32) * 0.1
    # (2H, N) -> transposed to (N, 2H): contraction dim on sublanes, 2H lane-dense.
    wqk = (jnp.concatenate([wq, wk], axis=0) * bn_scale).T.astype(jnp.bfloat16)
    wv = (wv * bn_scale).astype(jnp.bfloat16)
    alpha = jnp.zeros((1,), jnp.float32)       # Parameter(torch.zeros(1))
    return wqk, wv, alpha


# ----------------------------------------------------------------------------
# Pure-JAX reference (same folded params; mirrors the kernel's bf16 cast points).
# ----------------------------------------------------------------------------
def ref_forward(x, wqk_bf16, wv_bf16, alpha, H=HIDDEN):
    wqk = wqk_bf16.astype(jnp.float32)            # (N, 2H)
    wq, wk = wqk[:, :H].T, wqk[:, H:].T           # (H, N) each
    wv = wv_bf16.astype(jnp.float32)
    xq = x.astype(jnp.bfloat16).astype(jnp.float32)
    q = jnp.maximum(jnp.einsum('hn,bcn->bhc', wq, xq), 0.0)      # queries (B, H, C)
    k = jnp.maximum(jnp.einsum('hn,bcn->bhc', wk, xq), 0.0)
    keys = jnp.transpose(k, (0, 2, 1))                           # (B, C, H)
    scores = jnp.einsum('bch,bhd->bcd', keys, q)                 # (B, C, C)
    mx = jnp.max(scores, axis=-1, keepdims=True)
    attn = jax.nn.softmax(mx - scores, axis=-1)
    v = jnp.maximum(jnp.einsum('oc,bcn->bon', wv, xq), 0.0)      # (B, C, N)
    attn_b = (alpha.reshape(()) * attn).astype(jnp.bfloat16).astype(jnp.float32)
    v_b = v.astype(jnp.bfloat16).astype(jnp.float32)
    att = jnp.einsum('bij,bjn->bin', attn_b, v_b)                # (B, C, N)
    return att + x


if __name__ == "__main__":
    B, in_dim = 2, 8
    N = NPTS   # required to be 1024 by the module's Conv1d(1024, hidden, 1)

    key = jax.random.PRNGKey(0)
    kx, kp = jax.random.split(key)
    x = jax.random.normal(kx, (B, in_dim, N), jnp.float32)   # PyTorch (B, C, N)
    wqk, wv, alpha0 = make_params(kp, in_dim)

    fwd = jax.jit(channel_wise_attention)

    # Module as initialised: alpha = 0  ->  output == x exactly.
    out0 = fwd(x, wqk, wv, alpha0)
    jax.block_until_ready(out0)
    assert out0.shape == (B, in_dim, N)
    assert bool(jnp.allclose(out0, x, atol=1e-6))

    # Exercise the attended path with a nonzero alpha and check vs plain JAX.
    # Tolerance covers the bf16 matmul operands + approx-reciprocal softmax.
    alpha1 = jnp.full((1,), 0.5, jnp.float32)
    out1 = fwd(x, wqk, wv, alpha1)
    ref1 = ref_forward(x, wqk, wv, alpha1)
    jax.block_until_ready(out1)
    assert bool(jnp.allclose(out1, ref1, atol=5e-3, rtol=5e-3)), \
        float(jnp.max(jnp.abs(out1 - ref1)))

    print("KERNEL_OK")
</pallas_src>

<mosaic_0001>
module attributes {stable_mosaic.version = 11 : i64} {
  func.func @_chan_attn_kernel(%arg0: i32, %arg1: memref<16x1024xf32, #tpu.memory_space<vmem>>, %arg2: memref<1024x256xbf16, #tpu.memory_space<vmem>>, %arg3: memref<8x8xbf16, #tpu.memory_space<vmem>>, %arg4: memref<1xf32, #tpu.memory_space<smem>>, %arg5: memref<16x1024xf32, #tpu.memory_space<vmem>>) attributes {dimension_semantics = [#tpu.dimension_semantics<parallel>], iteration_bounds = array<i64: 1>, scalar_prefetch = 0 : i64, scratch_operands = 0 : i64, tpu.core_type = #tpu.core_type<tc>, window_params = [{transform_indices = @transform_0, window_bounds = array<i64: 16, 1024>}, {pipeline_mode = #tpu.pipeline_mode<synchronous>, transform_indices = @transform_1, window_bounds = array<i64: 1024, 256>}, {pipeline_mode = #tpu.pipeline_mode<synchronous>, transform_indices = @transform_2, window_bounds = array<i64: 8, 8>}, {transform_indices = @transform_3, window_bounds = array<i64: 1>}, {transform_indices = @transform_4, window_bounds = array<i64: 16, 1024>}]} {
    %c0 = arith.constant 0 : index
    %c0_0 = arith.constant 0 : index
    %0 = vector.load %arg1[%c0, %c0_0] : memref<16x1024xf32, #tpu.memory_space<vmem>>, vector<16x1024xf32>
    %1 = arith.truncf %0 : vector<16x1024xf32> to vector<16x1024xbf16>
    %c0_1 = arith.constant 0 : index
    %c0_2 = arith.constant 0 : index
    %2 = vector.load %arg2[%c0_1, %c0_2] : memref<1024x256xbf16, #tpu.memory_space<vmem>>, vector<1024x256xbf16>
    %c0_3 = arith.constant 0 : index
    %c0_4 = arith.constant 0 : index
    %3 = vector.load %arg3[%c0_3, %c0_4] : memref<8x8xbf16, #tpu.memory_space<vmem>>, vector<8x8xbf16>
    %c0_5 = arith.constant 0 : index
    %4 = memref.load %arg4[%c0_5] : memref<1xf32, #tpu.memory_space<smem>>
    %cst = arith.constant dense<0.000000e+00> : vector<16x256xf32>
    %5 = tpu.matmul %1, %2, %cst {dimension_numbers = #tpu.dot_dimension_numbers<[1], [0], [0], [1], [0, 0, 1, 1], [], []>} : vector<16x1024xbf16>, vector<1024x256xbf16>, vector<16x256xf32> -> vector<16x256xf32>
    %cst_6 = arith.constant 0.000000e+00 : f32
    %6 = vector.broadcast %cst_6 : f32 to vector<16x256xf32>
    %7 = arith.maximumf %5, %6 : vector<16x256xf32>
    %8 = vector.extract_strided_slice %7 {offsets = [0, 0], sizes = [8, 256], strides = [1, 1]} : vector<16x256xf32> to vector<8x256xf32>
    %9 = vector.extract_strided_slice %8 {offsets = [0, 0], sizes = [8, 128], strides = [1, 1]} : vector<8x256xf32> to vector<8x128xf32>
    %10 = vector.extract_strided_slice %8 {offsets = [0, 128], sizes = [8, 128], strides = [1, 1]} : vector<8x256xf32> to vector<8x128xf32>
    %cst_7 = arith.constant dense<0.000000e+00> : vector<8x8xf32>
    %11 = tpu.matmul %10, %9, %cst_7 {dimension_numbers = #tpu.dot_dimension_numbers<[1], [1], [0], [0], [0, 0, 1, 0], [], []>} : vector<8x128xf32>, vector<8x128xf32>, vector<8x8xf32> -> vector<8x8xf32>
    %cst_8 = arith.constant dense<0x7F800000> : vector<8xf32>
    %12 = vector.multi_reduction <minimumf>, %11, %cst_8 [1] : vector<8x8xf32> to vector<8xf32>
    %13 = vector.shape_cast %12 : vector<8xf32> to vector<8x1xf32>
    %14 = vector.broadcast %13 : vector<8x1xf32> to vector<8x8xf32>
    %15 = arith.subf %14, %11 : vector<8x8xf32>
    %16 = math.exp %15 : vector<8x8xf32>
    %cst_9 = arith.constant dense<0.000000e+00> : vector<8xf32>
    %17 = vector.multi_reduction <add>, %16, %cst_9 [1] : vector<8x8xf32> to vector<8xf32>
    %18 = vector.shape_cast %17 : vector<8xf32> to vector<8x1xf32>
    %19 = tpu.reciprocal %18 {approx = true} : vector<8x1xf32> -> vector<8x1xf32>
    %20 = vector.broadcast %19 : vector<8x1xf32> to vector<8x8xf32>
    %21 = arith.mulf %16, %20 : vector<8x8xf32>
    %22 = vector.broadcast %4 : f32 to vector<8x8xf32>
    %23 = arith.mulf %22, %21 : vector<8x8xf32>
    %24 = arith.truncf %23 : vector<8x8xf32> to vector<8x8xbf16>
    %25 = vector.extract_strided_slice %1 {offsets = [0, 0], sizes = [8, 1024], strides = [1, 1]} : vector<16x1024xbf16> to vector<8x1024xbf16>
    %cst_10 = arith.constant dense<0.000000e+00> : vector<8x1024xf32>
    %26 = tpu.matmul %3, %25, %cst_10 {dimension_numbers = #tpu.dot_dimension_numbers<[1], [0], [0], [1], [0, 0, 1, 1], [], []>} : vector<8x8xbf16>, vector<8x1024xbf16>, vector<8x1024xf32> -> vector<8x1024xf32>
    %cst_11 = arith.constant 0.000000e+00 : f32
    %27 = vector.broadcast %cst_11 : f32 to vector<8x1024xf32>
    %28 = arith.maximumf %26, %27 : vector<8x1024xf32>
    %29 = arith.truncf %28 : vector<8x1024xf32> to vector<8x1024xbf16>
    %cst_12 = arith.constant dense<0.000000e+00> : vector<8x1024xf32>
    %30 = tpu.matmul %24, %29, %cst_12 {dimension_numbers = #tpu.dot_dimension_numbers<[1], [0], [0], [1], [0, 0, 1, 1], [], []>} : vector<8x8xbf16>, vector<8x1024xbf16>, vector<8x1024xf32> -> vector<8x1024xf32>
    %31 = vector.extract_strided_slice %0 {offsets = [0, 0], sizes = [8, 1024], strides = [1, 1]} : vector<16x1024xf32> to vector<8x1024xf32>
    %32 = arith.addf %30, %31 : vector<8x1024xf32>
    %c0_13 = arith.constant 0 : index
    %c0_14 = arith.constant 0 : index
    %33 = vector.load %arg5[%c0_13, %c0_14] : memref<16x1024xf32, #tpu.memory_space<vmem>>, vector<8x1024xf32>
    tpu.vector_store %arg5[%c0_13, %c0_14], %32 {strides = array<i32>} : memref<16x1024xf32, #tpu.memory_space<vmem>>, vector<8x1024xf32>,
    %34 = vector.extract_strided_slice %7 {offsets = [8, 0], sizes = [8, 256], strides = [1, 1]} : vector<16x256xf32> to vector<8x256xf32>
    %35 = vector.extract_strided_slice %34 {offsets = [0, 0], sizes = [8, 128], strides = [1, 1]} : vector<8x256xf32> to vector<8x128xf32>
    %36 = vector.extract_strided_slice %34 {offsets = [0, 128], sizes = [8, 128], strides = [1, 1]} : vector<8x256xf32> to vector<8x128xf32>
    %cst_15 = arith.constant dense<0.000000e+00> : vector<8x8xf32>
    %37 = tpu.matmul %36, %35, %cst_15 {dimension_numbers = #tpu.dot_dimension_numbers<[1], [1], [0], [0], [0, 0, 1, 0], [], []>} : vector<8x128xf32>, vector<8x128xf32>, vector<8x8xf32> -> vector<8x8xf32>
    %cst_16 = arith.constant dense<0x7F800000> : vector<8xf32>
    %38 = vector.multi_reduction <minimumf>, %37, %cst_16 [1] : vector<8x8xf32> to vector<8xf32>
    %39 = vector.shape_cast %38 : vector<8xf32> to vector<8x1xf32>
    %40 = vector.broadcast %39 : vector<8x1xf32> to vector<8x8xf32>
    %41 = arith.subf %40, %37 : vector<8x8xf32>
    %42 = math.exp %41 : vector<8x8xf32>
    %cst_17 = arith.constant dense<0.000000e+00> : vector<8xf32>
    %43 = vector.multi_reduction <add>, %42, %cst_17 [1] : vector<8x8xf32> to vector<8xf32>
    %44 = vector.shape_cast %43 : vector<8xf32> to vector<8x1xf32>
    %45 = tpu.reciprocal %44 {approx = true} : vector<8x1xf32> -> vector<8x1xf32>
    %46 = vector.broadcast %45 : vector<8x1xf32> to vector<8x8xf32>
    %47 = arith.mulf %42, %46 : vector<8x8xf32>
    %48 = vector.broadcast %4 : f32 to vector<8x8xf32>
    %49 = arith.mulf %48, %47 : vector<8x8xf32>
    %50 = arith.truncf %49 : vector<8x8xf32> to vector<8x8xbf16>
    %51 = vector.extract_strided_slice %1 {offsets = [8, 0], sizes = [8, 1024], strides = [1, 1]} : vector<16x1024xbf16> to vector<8x1024xbf16>
    %cst_18 = arith.constant dense<0.000000e+00> : vector<8x1024xf32>
    %52 = tpu.matmul %3, %51, %cst_18 {dimension_numbers = #tpu.dot_dimension_numbers<[1], [0], [0], [1], [0, 0, 1, 1], [], []>} : vector<8x8xbf16>, vector<8x1024xbf16>, vector<8x1024xf32> -> vector<8x1024xf32>
    %cst_19 = arith.constant 0.000000e+00 : f32
    %53 = vector.broadcast %cst_19 : f32 to vector<8x1024xf32>
    %54 = arith.maximumf %52, %53 : vector<8x1024xf32>
    %55 = arith.truncf %54 : vector<8x1024xf32> to vector<8x1024xbf16>
    %cst_20 = arith.constant dense<0.000000e+00> : vector<8x1024xf32>
    %56 = tpu.matmul %50, %55, %cst_20 {dimension_numbers = #tpu.dot_dimension_numbers<[1], [0], [0], [1], [0, 0, 1, 1], [], []>} : vector<8x8xbf16>, vector<8x1024xbf16>, vector<8x1024xf32> -> vector<8x1024xf32>
    %57 = vector.extract_strided_slice %0 {offsets = [8, 0], sizes = [8, 1024], strides = [1, 1]} : vector<16x1024xf32> to vector<8x1024xf32>
    %58 = arith.addf %56, %57 : vector<8x1024xf32>
    %c8 = arith.constant 8 : index
    %c0_21 = arith.constant 0 : index
    %59 = vector.load %arg5[%c8, %c0_21] : memref<16x1024xf32, #tpu.memory_space<vmem>>, vector<8x1024xf32>
    tpu.vector_store %arg5[%c8, %c0_21], %58 {strides = array<i32>} : memref<16x1024xf32, #tpu.memory_space<vmem>>, vector<8x1024xf32>,
    return
  }
  func.func @transform_0(%arg0: i32) -> (i32, i32) {
    %c0_i32 = arith.constant 0 : i32
    %c0_i32_0 = arith.constant 0 : i32
    return %arg0, %c0_i32 : i32, i32
  }
  func.func @transform_1(%arg0: i32) -> (i32, i32) {
    %c0_i32 = arith.constant 0 : i32
    %c0_i32_0 = arith.constant 0 : i32
    %c0_i32_1 = arith.constant 0 : i32
    return %c0_i32, %c0_i32_0 : i32, i32
  }
  func.func @transform_2(%arg0: i32) -> (i32, i32) {
    %c0_i32 = arith.constant 0 : i32
    %c0_i32_0 = arith.constant 0 : i32
    %c0_i32_1 = arith.constant 0 : i32
    return %c0_i32, %c0_i32_0 : i32, i32
  }
  func.func @transform_3(%arg0: i32) -> i32 {
    %c0_i32 = arith.constant 0 : i32
    %c0_i32_0 = arith.constant 0 : i32
    return %c0_i32 : i32
  }
  func.func @transform_4(%arg0: i32) -> (i32, i32) {
    %c0_i32 = arith.constant 0 : i32
    %c0_i32_0 = arith.constant 0 : i32
    return %arg0, %c0_i32 : i32, i32
  }
}

</mosaic_0001>

<llo_original>
// kernel: channel_wise_attention.1
$region0: #{channel_wise_attention.1}
  #allocation0 [shape = 'u32[]', space=smem, size = 0x4, offset = 0x4, fixed_abs, tag = 'smem constant byte address 0x4 - core index']
  #allocation1 [shape = 'u32[144,128]{1,0:T(1,128)}', space=vmem, size = 0x12000, scoped, tag = 'internal scratch']
  #allocation2 [shape = 'f32[1]{0:T(128)S(6)}', space=smem, size = 0x200, scoped, tag = 'scoped memory for channel_wise_attention.1']
  %s0 = inlined_call_operand.hbm [shape: f32[16,1024], index: 0, kind: input, shape index: {}]
  %s1 = inlined_call_operand.hbm [shape: bf16[1024,256], index: 1, kind: input, shape index: {}]
  %s2 = inlined_call_operand.vmem [shape: bf16[8,8], index: 2, kind: input, shape index: {}]
  %s3 = inlined_call_operand.<no memory space> [shape: f32[1], index: 3, kind: input, shape index: {}]
  %s4 = inlined_call_operand.hbm [shape: f32[16,1024], index: 4, kind: output, shape index: {}]
  %s5 = sld [smem:[#allocation0]]
  $region34: #{channel_wise_attention.1} parent=0
    _
  %s7 = ssub.s32 1, %s5
  %s8 = scalar_select 0, %s7, %s5
  %9 = sst [smem:[#allocation2]] %s3
  $region1: #{channel_wise_attention.1} parent=0
    #allocation3 [shape = 'u8[65536]{0}', space=vmem, size = 0x10000, scoped, tag = 'input window, operand 0, single buffered']
    #allocation4 [shape = 's32[1]{0}', space=sflag, size = 0x4, scoped, tag = 'scoped memory for channel_wise_attention.1']
    #allocation5 [shape = 's32[1]{0}', space=sflag, size = 0x4, scoped, tag = 'scoped memory for channel_wise_attention.1']
    #allocation6 [shape = 'u8[524288]{0}', space=vmem, size = 0x80000, scoped, tag = 'input window, operand 1, single buffered']
    #allocation7 [shape = 's32[1]{0}', space=sflag, size = 0x4, scoped, tag = 'scoped memory for channel_wise_attention.1']
    #allocation8 [shape = 'u8[65536]{0}', space=vmem, size = 0x10000, scoped, tag = 'output window, operand 0, single buffered']
    %10 = vsyncpa [#allocation4], 0
    %11 = vsyncpa [#allocation7], 0
    %12 = vsyncpa [#allocation5], 0
    // Predicated region
    $region2: #{channel_wise_attention.1} parent=1 // pred_check
      _
    $region3: #{channel_wise_attention.1} parent=1 // pred_check_branch
      %14 = sbr.rel (0) target = $region5
    $region4: #{channel_wise_attention.1} parent=1 // pred_region
      %s16 = ssub.s32 2048, 2048
      %17 = vsyncadd [#allocation4], %s16
      %s18 = sshll.u32 [#allocation3], 4
      %s19 = int_to_ptr.vmem [resolvable:$true] %s18
      %24 = dma.hbm_to_vmem [thread:$0]  %s0, 2048, %s19, [#allocation4], 1024, 1024, 64
    $region5: #{channel_wise_attention.1} parent=1 // pred_fallthru
      _
    // Predicated region
    $region6: #{channel_wise_attention.1} parent=1 // pred_check
      _
    $region7: #{channel_wise_attention.1} parent=1 // pred_check_branch
      %26 = sbr.rel (0) target = $region9
    $region8: #{channel_wise_attention.1} parent=1 // pred_region
      %s28 = ssub.s32 16384, 16384
      %29 = vsyncadd [#allocation7], %s28
      %s30 = sshll.u32 [#allocation6], 4
      %s31 = int_to_ptr.vmem [resolvable:$true] %s30
      %36 = dma.hbm_to_vmem [thread:$0]  %s1, 16384, %s31, [#allocation7], 128, 128, 8
    $region9: #{channel_wise_attention.1} parent=1 // pred_fallthru
      _
    // Predicated region
    $region10: #{channel_wise_attention.1} parent=1 // pred_check
      _
    $region11: #{channel_wise_attention.1} parent=1 // pred_check_branch
      %38 = sbr.rel (0) target = $region13
    $region12: #{channel_wise_attention.1} parent=1 // pred_region
      _
    $region13: #{channel_wise_attention.1} parent=1 // pred_fallthru
      _
    // Predicated region
    $region14: #{channel_wise_attention.1} parent=1 // pred_check
      _
    $region15: #{channel_wise_attention.1} parent=1 // pred_check_branch
      %40 = sbr.rel (0) target = $region17
    $region16: #{channel_wise_attention.1} parent=1 // pred_region
      _
    $region17: #{channel_wise_attention.1} parent=1 // pred_fallthru
      _
    // Predicated region
    $region18: #{channel_wise_attention.1} parent=1 // pred_check
      _
    $region19: #{channel_wise_attention.1} parent=1 // pred_check_branch
      %42 = sbr.rel (0) target = $region21
    $region20: #{channel_wise_attention.1} parent=1 // pred_region
      %43 = dma.done [#allocation4], 2048
    $region21: #{channel_wise_attention.1} parent=1 // pred_fallthru
      _
    // Predicated region
    $region22: #{channel_wise_attention.1} parent=1 // pred_check
      _
    $region23: #{channel_wise_attention.1} parent=1 // pred_check_branch
      %45 = sbr.rel (0) target = $region25
    $region24: #{channel_wise_attention.1} parent=1 // pred_region
      %46 = dma.done [#allocation7], 16384
    $region25: #{channel_wise_attention.1} parent=1 // pred_fallthru
      _
    %v48 = vld [vmem:[#allocation3] sm:$0xff]
    %v49 = vld [vmem:[#allocation3 + $0x8] sm:$0xff]
    %v50 = vld [vmem:[#allocation3 + $0x10] sm:$0xff]
    %v51 = vld [vmem:[#allocation3 + $0x18] sm:$0xff]
    %v52 = vld [vmem:[#allocation3 + $0x20] sm:$0xff]
    %v53 = vld [vmem:[#allocation3 + $0x28] sm:$0xff]
    %v54 = vld [vmem:[#allocation3 + $0x30] sm:$0xff]
    %v55 = vld [vmem:[#allocation3 + $0x38] sm:$0xff]
    %v56 = vld [vmem:[#allocation3 + $0x40] sm:$0xff]
    %v57 = vld [vmem:[#allocation3 + $0x48] sm:$0xff]
    %v58 = vld [vmem:[#allocation3 + $0x50] sm:$0xff]
    %v59 = vld [vmem:[#allocation3 + $0x58] sm:$0xff]
    %v60 = vld [vmem:[#allocation3 + $0x60] sm:$0xff]
    %v61 = vld [vmem:[#allocation3 + $0x68] sm:$0xff]
    %v62 = vld [vmem:[#allocation3 + $0x70] sm:$0xff]
    %v63 = vld [vmem:[#allocation3 + $0x78] sm:$0xff]
    %v64 = vpack.c.bf16 %v56, %v48
    %v65 = vpack.c.bf16 %v57, %v49
    %v66 = vpack.c.bf16 %v58, %v50
    %v67 = vpack.c.bf16 %v59, %v51
    %v68 = vpack.c.bf16 %v60, %v52
    %v69 = vpack.c.bf16 %v61, %v53
    %v70 = vpack.c.bf16 %v62, %v54
    %v71 = vpack.c.bf16 %v63, %v55
    %v72 = vld [vmem:[#allocation6] sm:$0xff]
    %v73 = vld [vmem:[#allocation6 + $0x8] sm:$0xff]
    %v74 = vld [vmem:[#allocation6 + $0x10] sm:$0xff]
    %v75 = vld [vmem:[#allocation6 + $0x18] sm:$0xff]
    %v76 = vld [vmem:[#allocation6 + $0x20] sm:$0xff]
    %v77 = vld [vmem:[#allocation6 + $0x28] sm:$0xff]
    %v78 = vld [vmem:[#allocation6 + $0x30] sm:$0xff]
    %v79 = vld [vmem:[#allocation6 + $0x38] sm:$0xff]
    %v80 = vld [vmem:[#allocation6 + $0x40] sm:$0xff]
    %v81 = vld [vmem:[#allocation6 + $0x48] sm:$0xff]
    %v82 = vld [vmem:[#allocation6 + $0x50] sm:$0xff]
    %v83 = vld [vmem:[#allocation6 + $0x58] sm:$0xff]
    %v84 = vld [vmem:[#allocation6 + $0x60] sm:$0xff]
    %v85 = vld [vmem:[#allocation6 + $0x68] sm:$0xff]
    %v86 = vld [vmem:[#allocation6 + $0x70] sm:$0xff]
    %v87 = vld [vmem:[#allocation6 + $0x78] sm:$0xff]
    %v88 = vld [vmem:[#allocation6 + $0x80] sm:$0xff]
    %v89 = vld [vmem:[#allocation6 + $0x88] sm:$0xff]
    %v90 = vld [vmem:[#allocation6 + $0x90] sm:$0xff]
    %v91 = vld [vmem:[#allocation6 + $0x98] sm:$0xff]
    %v92 = vld [vmem:[#allocation6 + $0xa0] sm:$0xff]
    %v93 = vld [vmem:[#allocation6 + $0xa8] sm:$0xff]
    %v94 = vld [vmem:[#allocation6 + $0xb0] sm:$0xff]
    %v95 = vld [vmem:[#allocation6 + $0xb8] sm:$0xff]
    %v96 = vld [vmem:[#allocation6 + $0xc0] sm:$0xff]
    %v97 = vld [vmem:[#allocation6 + $0xc8] sm:$0xff]
    %v98 = vld [vmem:[#allocation6 + $0xd0] sm:$0xff]
    %v99 = vld [vmem:[#allocation6 + $0xd8] sm:$0xff]
    %v100 = vld [vmem:[#allocation6 + $0xe0] sm:$0xff]
    %v101 = vld [vmem:[#allocation6 + $0xe8] sm:$0xff]
    %v102 = vld [vmem:[#allocation6 + $0xf0] sm:$0xff]
    %v103 = vld [vmem:[#allocation6 + $0xf8] sm:$0xff]
    %v104 = vld [vmem:[#allocation6 + $0x100] sm:$0xff]
    %v105 = vld [vmem:[#allocation6 + $0x108] sm:$0xff]
    %v106 = vld [vmem:[#allocation6 + $0x110] sm:$0xff]
    %v107 = vld [vmem:[#allocation6 + $0x118] sm:$0xff]
    %v108 = vld [vmem:[#allocation6 + $0x120] sm:$0xff]
    %v109 = vld [vmem:[#allocation6 + $0x128] sm:$0xff]
    %v110 = vld [vmem:[#allocation6 + $0x130] sm:$0xff]
    %v111 = vld [vmem:[#allocation6 + $0x138] sm:$0xff]
    %v112 = vld [vmem:[#allocation6 + $0x140] sm:$0xff]
    %v113 = vld [vmem:[#allocation6 + $0x148] sm:$0xff]
    %v114 = vld [vmem:[#allocation6 + $0x150] sm:$0xff]
    %v115 = vld [vmem:[#allocation6 + $0x158] sm:$0xff]
    %v116 = vld [vmem:[#allocation6 + $0x160] sm:$0xff]
    %v117 = vld [vmem:[#allocation6 + $0x168] sm:$0xff]
    %v118 = vld [vmem:[#allocation6 + $0x170] sm:$0xff]
    %v119 = vld [vmem:[#allocation6 + $0x178] sm:$0xff]
    %v120 = vld [vmem:[#allocation6 + $0x180] sm:$0xff]
    %v121 = vld [vmem:[#allocation6 + $0x188] sm:$0xff]
    %v122 = vld [vmem:[#allocation6 + $0x190] sm:$0xff]
    %v123 = vld [vmem:[#allocation6 + $0x198] sm:$0xff]
    %v124 = vld [vmem:[#allocation6 + $0x1a0] sm:$0xff]
    %v125 = vld [vmem:[#allocation6 + $0x1a8] sm:$0xff]
    %v126 = vld [vmem:[#allocation6 + $0x1b0] sm:$0xff]
    %v127 = vld [vmem:[#allocation6 + $0x1b8] sm:$0xff]
    %v128 = vld [vmem:[#allocation6 + $0x1c0] sm:$0xff]
    %v129 = vld [vmem:[#allocation6 + $0x1c8] sm:$0xff]
    %v130 = vld [vmem:[#allocation6 + $0x1d0] sm:$0xff]
    %v131 = vld [vmem:[#allocation6 + $0x1d8] sm:$0xff]
    %v132 = vld [vmem:[#allocation6 + $0x1e0] sm:$0xff]
    %v133 = vld [vmem:[#allocation6 + $0x1e8] sm:$0xff]
    %v134 = vld [vmem:[#allocation6 + $0x1f0] sm:$0xff]
    %v135 = vld [vmem:[#allocation6 + $0x1f8] sm:$0xff]
    %v136 = vld [vmem:[#allocation6 + $0x200] sm:$0xff]
    %v137 = vld [vmem:[#allocation6 + $0x208] sm:$0xff]
    %v138 = vld [vmem:[#allocation6 + $0x210] sm:$0xff]
    %v139 = vld [vmem:[#allocation6 + $0x218] sm:$0xff]
    %v140 = vld [vmem:[#allocation6 + $0x220] sm:$0xff]
    %v141 = vld [vmem:[#allocation6 + $0x228] sm:$0xff]
    %v142 = vld [vmem:[#allocation6 + $0x230] sm:$0xff]
    %v143 = vld [vmem:[#allocation6 + $0x238] sm:$0xff]
    %v144 = vld [vmem:[#allocation6 + $0x240] sm:$0xff]
    %v145 = vld [vmem:[#allocation6 + $0x248] sm:$0xff]
    %v146 = vld [vmem:[#allocation6 + $0x250] sm:$0xff]
    %v147 = vld [vmem:[#allocation6 + $0x258] sm:$0xff]
    %v148 = vld [vmem:[#allocation6 + $0x260] sm:$0xff]
    %v149 = vld [vmem:[#allocation6 + $0x268] sm:$0xff]
    %v150 = vld [vmem:[#allocation6 + $0x270] sm:$0xff]
    %v151 = vld [vmem:[#allocation6 + $0x278] sm:$0xff]
    %v152 = vld [vmem:[#allocation6 + $0x280] sm:$0xff]
    %v153 = vld [vmem:[#allocation6 + $0x288] sm:$0xff]
    %v154 = vld [vmem:[#allocation6 + $0x290] sm:$0xff]
    %v155 = vld [vmem:[#allocation6 + $0x298] sm:$0xff]
    %v156 = vld [vmem:[#allocation6 + $0x2a0] sm:$0xff]
    %v157 = vld [vmem:[#allocation6 + $0x2a8] sm:$0xff]
    %v158 = vld [vmem:[#allocation6 + $0x2b0] sm:$0xff]
    %v159 = vld [vmem:[#allocation6 + $0x2b8] sm:$0xff]
    %v160 = vld [vmem:[#allocation6 + $0x2c0] sm:$0xff]
    %v161 = vld [vmem:[#allocation6 + $0x2c8] sm:$0xff]
    %v162 = vld [vmem:[#allocation6 + $0x2d0] sm:$0xff]
    %v163 = vld [vmem:[#allocation6 + $0x2d8] sm:$0xff]
    %v164 = vld [vmem:[#allocation6 + $0x2e0] sm:$0xff]
    %v165 = vld [vmem:[#allocation6 + $0x2e8] sm:$0xff]
    %v166 = vld [vmem:[#allocation6 + $0x2f0] sm:$0xff]
    %v167 = vld [vmem:[#allocation6 + $0x2f8] sm:$0xff]
    %v168 = vld [vmem:[#allocation6 + $0x300] sm:$0xff]
    %v169 = vld [vmem:[#allocation6 + $0x308] sm:$0xff]
    %v170 = vld [vmem:[#allocation6 + $0x310] sm:$0xff]
    %v171 = vld [vmem:[#allocation6 + $0x318] sm:$0xff]
    %v172 = vld [vmem:[#allocation6 + $0x320] sm:$0xff]
    %v173 = vld [vmem:[#allocation6 + $0x328] sm:$0xff]
    %v174 = vld [vmem:[#allocation6 + $0x330] sm:$0xff]
    %v175 = vld [vmem:[#allocation6 + $0x338] sm:$0xff]
    %v176 = vld [vmem:[#allocation6 + $0x340] sm:$0xff]
    %v177 = vld [vmem:[#allocation6 + $0x348] sm:$0xff]
    %v178 = vld [vmem:[#allocation6 + $0x350] sm:$0xff]
    %v179 = vld [vmem:[#allocation6 + $0x358] sm:$0xff]
    %v180 = vld [vmem:[#allocation6 + $0x360] sm:$0xff]
    %v181 = vld [vmem:[#allocation6 + $0x368] sm:$0xff]
    %v182 = vld [vmem:[#allocation6 + $0x370] sm:$0xff]
    %v183 = vld [vmem:[#allocation6 + $0x378] sm:$0xff]
    %v184 = vld [vmem:[#allocation6 + $0x380] sm:$0xff]
    %v185 = vld [vmem:[#allocation6 + $0x388] sm:$0xff]
    %v186 = vld [vmem:[#allocation6 + $0x390] sm:$0xff]
    %v187 = vld [vmem:[#allocation6 + $0x398] sm:$0xff]
    %v188 = vld [vmem:[#allocation6 + $0x3a0] sm:$0xff]
    %v189 = vld [vmem:[#allocation6 + $0x3a8] sm:$0xff]
    %v190 = vld [vmem:[#allocation6 + $0x3b0] sm:$0xff]
    %v191 = vld [vmem:[#allocation6 + $0x3b8] sm:$0xff]
    %v192 = vld [vmem:[#allocation6 + $0x3c0] sm:$0xff]
    %v193 = vld [vmem:[#allocation6 + $0x3c8] sm:$0xff]
    %v194 = vld [vmem:[#allocation6 + $0x3d0] sm:$0xff]
    %v195 = vld [vmem:[#allocation6 + $0x3d8] sm:$0xff]
    %v196 = vld [vmem:[#allocation6 + $0x3e0] sm:$0xff]
    %v197 = vld [vmem:[#allocation6 + $0x3e8] sm:$0xff]
    %v198 = vld [vmem:[#allocation6 + $0x3f0] sm:$0xff]
    %v199 = vld [vmem:[#allocation6 + $0x3f8] sm:$0xff]
    %v200 = vld [vmem:[%s2] sm:$0xf]
    %s201 = sld [smem:[#allocation2]]
    %v330 = vunpack.c.l.b16 %v72
    %v331 = vunpack.c.h.b16 %v72
    %v332 = vunpack.c.l.b16 %v73
    %v333 = vunpack.c.h.b16 %v73
    %v334 = vunpack.c.l.b16 %v74
    %v335 = vunpack.c.h.b16 %v74
    %v336 = vunpack.c.l.b16 %v75
    %v337 = vunpack.c.h.b16 %v75
    %v338 = vunpack.c.l.b16 %v76
    %v339 = vunpack.c.h.b16 %v76
    %v340 = vunpack.c.l.b16 %v77
    %v341 = vunpack.c.h.b16 %v77
    %v342 = vunpack.c.l.b16 %v78
    %v343 = vunpack.c.h.b16 %v78
    %v344 = vunpack.c.l.b16 %v79
    %v345 = vunpack.c.h.b16 %v79
    %v346 = vunpack.c.l.b16 %v80
    %v347 = vunpack.c.h.b16 %v80
    %v348 = vunpack.c.l.b16 %v81
    %v349 = vunpack.c.h.b16 %v81
    %v350 = vunpack.c.l.b16 %v82
    %v351 = vunpack.c.h.b16 %v82
    %v352 = vunpack.c.l.b16 %v83
    %v353 = vunpack.c.h.b16 %v83
    %v354 = vunpack.c.l.b16 %v84
    %v355 = vunpack.c.h.b16 %v84
    %v356 = vunpack.c.l.b16 %v85
    %v357 = vunpack.c.h.b16 %v85
    %v358 = vunpack.c.l.b16 %v86
    %v359 = vunpack.c.h.b16 %v86
    %v360 = vunpack.c.l.b16 %v87
    %v361 = vunpack.c.h.b16 %v87
    %v362 = vunpack.c.l.b16 %v88
    %v363 = vunpack.c.h.b16 %v88
    %v364 = vunpack.c.l.b16 %v89
    %v365 = vunpack.c.h.b16 %v89
    %v366 = vunpack.c.l.b16 %v90
    %v367 = vunpack.c.h.b16 %v90
    %v368 = vunpack.c.l.b16 %v91
    %v369 = vunpack.c.h.b16 %v91
    %v370 = vunpack.c.l.b16 %v92
    %v371 = vunpack.c.h.b16 %v92
    %v372 = vunpack.c.l.b16 %v93
    %v373 = vunpack.c.h.b16 %v93
    %v374 = vunpack.c.l.b16 %v94
    %v375 = vunpack.c.h.b16 %v94
    %v376 = vunpack.c.l.b16 %v95
    %v377 = vunpack.c.h.b16 %v95
    %v378 = vunpack.c.l.b16 %v96
    %v379 = vunpack.c.h.b16 %v96
    %v380 = vunpack.c.l.b16 %v97
    %v381 = vunpack.c.h.b16 %v97
    %v382 = vunpack.c.l.b16 %v98
    %v383 = vunpack.c.h.b16 %v98
    %v384 = vunpack.c.l.b16 %v99
    %v385 = vunpack.c.h.b16 %v99
    %v386 = vunpack.c.l.b16 %v100
    %v387 = vunpack.c.h.b16 %v100
    %v388 = vunpack.c.l.b16 %v101
    %v389 = vunpack.c.h.b16 %v101
    %v390 = vunpack.c.l.b16 %v102
    %v391 = vunpack.c.h.b16 %v102
    %v392 = vunpack.c.l.b16 %v103
    %v393 = vunpack.c.h.b16 %v103
    %v394 = vunpack.c.l.b16 %v104
    %v395 = vunpack.c.h.b16 %v104
    %v396 = vunpack.c.l.b16 %v105
    %v397 = vunpack.c.h.b16 %v105
    %v398 = vunpack.c.l.b16 %v106
    %v399 = vunpack.c.h.b16 %v106
    %v400 = vunpack.c.l.b16 %v107
    %v401 = vunpack.c.h.b16 %v107
    %v402 = vunpack.c.l.b16 %v108
    %v403 = vunpack.c.h.b16 %v108
    %v404 = vunpack.c.l.b16 %v109
    %v405 = vunpack.c.h.b16 %v109
    %v406 = vunpack.c.l.b16 %v110
    %v407 = vunpack.c.h.b16 %v110
    %v408 = vunpack.c.l.b16 %v111
    %v409 = vunpack.c.h.b16 %v111
    %v410 = vunpack.c.l.b16 %v112
    %v411 = vunpack.c.h.b16 %v112
    %v412 = vunpack.c.l.b16 %v113
    %v413 = vunpack.c.h.b16 %v113
    %v414 = vunpack.c.l.b16 %v114
    %v415 = vunpack.c.h.b16 %v114
    %v416 = vunpack.c.l.b16 %v115
    %v417 = vunpack.c.h.b16 %v115
    %v418 = vunpack.c.l.b16 %v116
    %v419 = vunpack.c.h.b16 %v116
    %v420 = vunpack.c.l.b16 %v117
    %v421 = vunpack.c.h.b16 %v117
    %v422 = vunpack.c.l.b16 %v118
    %v423 = vunpack.c.h.b16 %v118
    %v424 = vunpack.c.l.b16 %v119
    %v425 = vunpack.c.h.b16 %v119
    %v426 = vunpack.c.l.b16 %v120
    %v427 = vunpack.c.h.b16 %v120
    %v428 = vunpack.c.l.b16 %v121
    %v429 = vunpack.c.h.b16 %v121
    %v430 = vunpack.c.l.b16 %v122
    %v431 = vunpack.c.h.b16 %v122
    %v432 = vunpack.c.l.b16 %v123
    %v433 = vunpack.c.h.b16 %v123
    %v434 = vunpack.c.l.b16 %v124
    %v435 = vunpack.c.h.b16 %v124
    %v436 = vunpack.c.l.b16 %v125
    %v437 = vunpack.c.h.b16 %v125
    %v438 = vunpack.c.l.b16 %v126
    %v439 = vunpack.c.h.b16 %v126
    %v440 = vunpack.c.l.b16 %v127
    %v441 = vunpack.c.h.b16 %v127
    %v442 = vunpack.c.l.b16 %v128
    %v443 = vunpack.c.h.b16 %v128
    %v444 = vunpack.c.l.b16 %v129
    %v445 = vunpack.c.h.b16 %v129
    %v446 = vunpack.c.l.b16 %v130
    %v447 = vunpack.c.h.b16 %v130
    %v448 = vunpack.c.l.b16 %v131
    %v449 = vunpack.c.h.b16 %v131
    %v450 = vunpack.c.l.b16 %v132
    %v451 = vunpack.c.h.b16 %v132
    %v452 = vunpack.c.l.b16 %v133
    %v453 = vunpack.c.h.b16 %v133
    %v454 = vunpack.c.l.b16 %v134
    %v455 = vunpack.c.h.b16 %v134
    %v456 = vunpack.c.l.b16 %v135
    %v457 = vunpack.c.h.b16 %v135
    %v458 = vunpack.c.l.b16 %v136
    %v459 = vunpack.c.h.b16 %v136
    %v460 = vunpack.c.l.b16 %v137
    %v461 = vunpack.c.h.b16 %v137
    %v462 = vunpack.c.l.b16 %v138
    %v463 = vunpack.c.h.b16 %v138
    %v464 = vunpack.c.l.b16 %v139
    %v465 = vunpack.c.h.b16 %v139
    %v466 = vunpack.c.l.b16 %v140
    %v467 = vunpack.c.h.b16 %v140
    %v468 = vunpack.c.l.b16 %v141
    %v469 = vunpack.c.h.b16 %v141
    %v470 = vunpack.c.l.b16 %v142
    %v471 = vunpack.c.h.b16 %v142
    %v472 = vunpack.c.l.b16 %v143
    %v473 = vunpack.c.h.b16 %v143
    %v474 = vunpack.c.l.b16 %v144
    %v475 = vunpack.c.h.b16 %v144
    %v476 = vunpack.c.l.b16 %v145
    %v477 = vunpack.c.h.b16 %v145
    %v478 = vunpack.c.l.b16 %v146
    %v479 = vunpack.c.h.b16 %v146
    %v480 = vunpack.c.l.b16 %v147
    %v481 = vunpack.c.h.b16 %v147
    %v482 = vunpack.c.l.b16 %v148
    %v483 = vunpack.c.h.b16 %v148
    %v484 = vunpack.c.l.b16 %v149
    %v485 = vunpack.c.h.b16 %v149
    %v486 = vunpack.c.l.b16 %v150
    %v487 = vunpack.c.h.b16 %v150
    %v488 = vunpack.c.l.b16 %v151
    %v489 = vunpack.c.h.b16 %v151
    %v490 = vunpack.c.l.b16 %v152
    %v491 = vunpack.c.h.b16 %v152
    %v492 = vunpack.c.l.b16 %v153
    %v493 = vunpack.c.h.b16 %v153
    %v494 = vunpack.c.l.b16 %v154
    %v495 = vunpack.c.h.b16 %v154
    %v496 = vunpack.c.l.b16 %v155
    %v497 = vunpack.c.h.b16 %v155
    %v498 = vunpack.c.l.b16 %v156
    %v499 = vunpack.c.h.b16 %v156
    %v500 = vunpack.c.l.b16 %v157
    %v501 = vunpack.c.h.b16 %v157
    %v502 = vunpack.c.l.b16 %v158
    %v503 = vunpack.c.h.b16 %v158
    %v504 = vunpack.c.l.b16 %v159
    %v505 = vunpack.c.h.b16 %v159
    %v506 = vunpack.c.l.b16 %v160
    %v507 = vunpack.c.h.b16 %v160
    %v508 = vunpack.c.l.b16 %v161
    %v509 = vunpack.c.h.b16 %v161
    %v510 = vunpack.c.l.b16 %v162
    %v511 = vunpack.c.h.b16 %v162
    %v512 = vunpack.c.l.b16 %v163
    %v513 = vunpack.c.h.b16 %v163
    %v514 = vunpack.c.l.b16 %v164
    %v515 = vunpack.c.h.b16 %v164
    %v516 = vunpack.c.l.b16 %v165
    %v517 = vunpack.c.h.b16 %v165
    %v518 = vunpack.c.l.b16 %v166
    %v519 = vunpack.c.h.b16 %v166
    %v520 = vunpack.c.l.b16 %v167
    %v521 = vunpack.c.h.b16 %v167
    %v522 = vunpack.c.l.b16 %v168
    %v523 = vunpack.c.h.b16 %v168
    %v524 = vunpack.c.l.b16 %v169
    %v525 = vunpack.c.h.b16 %v169
    %v526 = vunpack.c.l.b16 %v170
    %v527 = vunpack.c.h.b16 %v170
    %v528 = vunpack.c.l.b16 %v171
    %v529 = vunpack.c.h.b16 %v171
    %v530 = vunpack.c.l.b16 %v172
    %v531 = vunpack.c.h.b16 %v172
    %v532 = vunpack.c.l.b16 %v173
    %v533 = vunpack.c.h.b16 %v173
    %v534 = vunpack.c.l.b16 %v174
    %v535 = vunpack.c.h.b16 %v174
    %v536 = vunpack.c.l.b16 %v175
    %v537 = vunpack.c.h.b16 %v175
    %v538 = vunpack.c.l.b16 %v176
    %v539 = vunpack.c.h.b16 %v176
    %v540 = vunpack.c.l.b16 %v177
    %v541 = vunpack.c.h.b16 %v177
    %v542 = vunpack.c.l.b16 %v178
    %v543 = vunpack.c.h.b16 %v178
    %v544 = vunpack.c.l.b16 %v179
    %v545 = vunpack.c.h.b16 %v179
    %v546 = vunpack.c.l.b16 %v180
    %v547 = vunpack.c.h.b16 %v180
    %v548 = vunpack.c.l.b16 %v181
    %v549 = vunpack.c.h.b16 %v181
    %v550 = vunpack.c.l.b16 %v182
    %v551 = vunpack.c.h.b16 %v182
    %v552 = vunpack.c.l.b16 %v183
    %v553 = vunpack.c.h.b16 %v183
    %v554 = vunpack.c.l.b16 %v184
    %v555 = vunpack.c.h.b16 %v184
    %v556 = vunpack.c.l.b16 %v185
    %v557 = vunpack.c.h.b16 %v185
    %v558 = vunpack.c.l.b16 %v186
    %v559 = vunpack.c.h.b16 %v186
    %v560 = vunpack.c.l.b16 %v187
    %v561 = vunpack.c.h.b16 %v187
    %v562 = vunpack.c.l.b16 %v188
    %v563 = vunpack.c.h.b16 %v188
    %v564 = vunpack.c.l.b16 %v189
    %v565 = vunpack.c.h.b16 %v189
    %v566 = vunpack.c.l.b16 %v190
    %v567 = vunpack.c.h.b16 %v190
    %v568 = vunpack.c.l.b16 %v191
    %v569 = vunpack.c.h.b16 %v191
    %v570 = vunpack.c.l.b16 %v192
    %v571 = vunpack.c.h.b16 %v192
    %v572 = vunpack.c.l.b16 %v193
    %v573 = vunpack.c.h.b16 %v193
    %v574 = vunpack.c.l.b16 %v194
    %v575 = vunpack.c.h.b16 %v194
    %v576 = vunpack.c.l.b16 %v195
    %v577 = vunpack.c.h.b16 %v195
    %v578 = vunpack.c.l.b16 %v196
    %v579 = vunpack.c.h.b16 %v196
    %v580 = vunpack.c.l.b16 %v197
    %v581 = vunpack.c.h.b16 %v197
    %v582 = vunpack.c.l.b16 %v198
    %v583 = vunpack.c.h.b16 %v198
    %v584 = vunpack.c.l.b16 %v199
    %v585 = vunpack.c.h.b16 %v199
    %v586 = vpack.c.b16 %v332, %v330
    %v587 = vpack.c.b16 %v333, %v331
    %v588 = vpack.c.b16 %v336, %v334
    %v589 = vpack.c.b16 %v337, %v335
    %v590 = vpack.c.b16 %v340, %v338
    %v591 = vpack.c.b16 %v341, %v339
    %v592 = vpack.c.b16 %v344, %v342
    %v593 = vpack.c.b16 %v345, %v343
    %v594 = vpack.c.b16 %v348, %v346
    %v595 = vpack.c.b16 %v349, %v347
    %v596 = vpack.c.b16 %v352, %v350
    %v597 = vpack.c.b16 %v353, %v351
    %v598 = vpack.c.b16 %v356, %v354
    %v599 = vpack.c.b16 %v357, %v355
    %v600 = vpack.c.b16 %v360, %v358
    %v601 = vpack.c.b16 %v361, %v359
    %v602 = vpack.c.b16 %v364, %v362
    %v603 = vpack.c.b16 %v365, %v363
    %v604 = vpack.c.b16 %v368, %v366
    %v605 = vpack.c.b16 %v369, %v367
    %v606 = vpack.c.b16 %v372, %v370
    %v607 = vpack.c.b16 %v373, %v371
    %v608 = vpack.c.b16 %v376, %v374
    %v609 = vpack.c.b16 %v377, %v375
    %v610 = vpack.c.b16 %v380, %v378
    %v611 = vpack.c.b16 %v381, %v379
    %v612 = vpack.c.b16 %v384, %v382
    %v613 = vpack.c.b16 %v385, %v383
    %v614 = vpack.c.b16 %v388, %v386
    %v615 = vpack.c.b16 %v389, %v387
    %v616 = vpack.c.b16 %v392, %v390
    %v617 = vpack.c.b16 %v393, %v391
    %v618 = vpack.c.b16 %v396, %v394
    %v619 = vpack.c.b16 %v397, %v395
    %v620 = vpack.c.b16 %v400, %v398
    %v621 = vpack.c.b16 %v401, %v399
    %v622 = vpack.c.b16 %v404, %v402
    %v623 = vpack.c.b16 %v405, %v403
    %v624 = vpack.c.b16 %v408, %v406
    %v625 = vpack.c.b16 %v409, %v407
    %v626 = vpack.c.b16 %v412, %v410
    %v627 = vpack.c.b16 %v413, %v411
    %v628 = vpack.c.b16 %v416, %v414
    %v629 = vpack.c.b16 %v417, %v415
    %v630 = vpack.c.b16 %v420, %v418
    %v631 = vpack.c.b16 %v421, %v419
    %v632 = vpack.c.b16 %v424, %v422
    %v633 = vpack.c.b16 %v425, %v423
    %v634 = vpack.c.b16 %v428, %v426
    %v635 = vpack.c.b16 %v429, %v427
    %v636 = vpack.c.b16 %v432, %v430
    %v637 = vpack.c.b16 %v433, %v431
    %v638 = vpack.c.b16 %v436, %v434
    %v639 = vpack.c.b16 %v437, %v435
    %v640 = vpack.c.b16 %v440, %v438
    %v641 = vpack.c.b16 %v441, %v439
    %v642 = vpack.c.b16 %v444, %v442
    %v643 = vpack.c.b16 %v445, %v443
    %v644 = vpack.c.b16 %v448, %v446
    %v645 = vpack.c.b16 %v449, %v447
    %v646 = vpack.c.b16 %v452, %v450
    %v647 = vpack.c.b16 %v453, %v451
    %v648 = vpack.c.b16 %v456, %v454
    %v649 = vpack.c.b16 %v457, %v455
    %v650 = vpack.c.b16 %v460, %v458
    %v651 = vpack.c.b16 %v461, %v459
    %v652 = vpack.c.b16 %v464, %v462
    %v653 = vpack.c.b16 %v465, %v463
    %v654 = vpack.c.b16 %v468, %v466
    %v655 = vpack.c.b16 %v469, %v467
    %v656 = vpack.c.b16 %v472, %v470
    %v657 = vpack.c.b16 %v473, %v471
    %v658 = vpack.c.b16 %v476, %v474
    %v659 = vpack.c.b16 %v477, %v475
    %v660 = vpack.c.b16 %v480, %v478
    %v661 = vpack.c.b16 %v481, %v479
    %v662 = vpack.c.b16 %v484, %v482
    %v663 = vpack.c.b16 %v485, %v483
    %v664 = vpack.c.b16 %v488, %v486
    %v665 = vpack.c.b16 %v489, %v487
    %v666 = vpack.c.b16 %v492, %v490
    %v667 = vpack.c.b16 %v493, %v491
    %v668 = vpack.c.b16 %v496, %v494
    %v669 = vpack.c.b16 %v497, %v495
    %v670 = vpack.c.b16 %v500, %v498
    %v671 = vpack.c.b16 %v501, %v499
    %v672 = vpack.c.b16 %v504, %v502
    %v673 = vpack.c.b16 %v505, %v503
    %v674 = vpack.c.b16 %v508, %v506
    %v675 = vpack.c.b16 %v509, %v507
    %v676 = vpack.c.b16 %v512, %v510
    %v677 = vpack.c.b16 %v513, %v511
    %v678 = vpack.c.b16 %v516, %v514
    %v679 = vpack.c.b16 %v517, %v515
    %v680 = vpack.c.b16 %v520, %v518
    %v681 = vpack.c.b16 %v521, %v519
    %v682 = vpack.c.b16 %v524, %v522
    %v683 = vpack.c.b16 %v525, %v523
    %v684 = vpack.c.b16 %v528, %v526
    %v685 = vpack.c.b16 %v529, %v527
    %v686 = vpack.c.b16 %v532, %v530
    %v687 = vpack.c.b16 %v533, %v531
    %v688 = vpack.c.b16 %v536, %v534
    %v689 = vpack.c.b16 %v537, %v535
    %v690 = vpack.c.b16 %v540, %v538
    %v691 = vpack.c.b16 %v541, %v539
    %v692 = vpack.c.b16 %v544, %v542
    %v693 = vpack.c.b16 %v545, %v543
    %v694 = vpack.c.b16 %v548, %v546
    %v695 = vpack.c.b16 %v549, %v547
    %v696 = vpack.c.b16 %v552, %v550
    %v697 = vpack.c.b16 %v553, %v551
    %v698 = vpack.c.b16 %v556, %v554
    %v699 = vpack.c.b16 %v557, %v555
    %v700 = vpack.c.b16 %v560, %v558
    %v701 = vpack.c.b16 %v561, %v559
    %v702 = vpack.c.b16 %v564, %v562
    %v703 = vpack.c.b16 %v565, %v563
    %v704 = vpack.c.b16 %v568, %v566
    %v705 = vpack.c.b16 %v569, %v567
    %v706 = vpack.c.b16 %v572, %v570
    %v707 = vpack.c.b16 %v573, %v571
    %v708 = vpack.c.b16 %v576, %v574
    %v709 = vpack.c.b16 %v577, %v575
    %v710 = vpack.c.b16 %v580, %v578
    %v711 = vpack.c.b16 %v581, %v579
    %v712 = vpack.c.b16 %v584, %v582
    %v713 = vpack.c.b16 %v585, %v583
    %842 = vmatprep.subr.bf16.mxu0 %v587
    %843 = vmatpush1.bf16.msra.mxu0 %v586
    %844 = vmatprep.subr.bf16.mxu0 %v589
    %845 = vmatpush1.bf16.msra.mxu0 %v588
    %846 = vmatprep.subr.bf16.mxu0 %v591
    %847 = vmatpush1.bf16.msra.mxu0 %v590
    %848 = vmatprep.subr.bf16.mxu0 %v593
    %849 = vmatpush1.bf16.msra.mxu0 %v592
    %850 = vmatprep.subr.bf16.mxu0 %v595
    %851 = vmatpush1.bf16.msra.mxu0 %v594
    %852 = vmatprep.subr.bf16.mxu0 %v597
    %853 = vmatpush1.bf16.msra.mxu0 %v596
    %854 = vmatprep.subr.bf16.mxu0 %v599
    %855 = vmatpush1.bf16.msra.mxu0 %v598
    %856 = vmatprep.subr.bf16.mxu0 %v601
    %857 = vmatpush1.bf16.msra.mxu0 %v600
    %858 = vmatprep.subr.bf16.mxu0 %v603
    %859 = vmatpush1.bf16.msra.mxu0 %v602
    %860 = vmatprep.subr.bf16.mxu0 %v605
    %861 = vmatpush1.bf16.msra.mxu0 %v604
    %862 = vmatprep.subr.bf16.mxu0 %v607
    %863 = vmatpush1.bf16.msra.mxu0 %v606
    %864 = vmatprep.subr.bf16.mxu0 %v609
    %865 = vmatpush1.bf16.msra.mxu0 %v608
    %866 = vmatprep.subr.bf16.mxu0 %v611
    %867 = vmatpush1.bf16.msra.mxu0 %v610
    %868 = vmatprep.subr.bf16.mxu0 %v613
    %869 = vmatpush1.bf16.msra.mxu0 %v612
    %870 = vmatprep.subr.bf16.mxu0 %v615
    %871 = vmatpush1.bf16.msra.mxu0 %v614
    %872 = vmatprep.subr.bf16.mxu0 %v617
    %873 = vmatpush1.bf16.msra.mxu0 %v616
    %874 = vmatprep.mubr.bf16.mxu0 %v65
    %875 = vmatmul.mubr.bf16.gmra.mrb[0].mxu0 %v64
    %v876 = vpop.f32.mrb[0].mxu0
    %v877 = vadd.f32 0.0, %v876
    %v878 = vpop.f32.mrb[0].mxu0
    %v879 = vadd.f32 0.0, %v878
    %v880 = vpop.f32.mrb[0].mxu0
    %v881 = vadd.f32 0.0, %v880
    %v882 = vpop.f32.mrb[0].mxu0
    %v883 = vadd.f32 0.0, %v882
    %884 = vdwg.mxu0
    %885 = vmatprep.subr.bf16.mxu0 %v619
    %886 = vmatpush1.bf16.msra.mxu0 %v618
    %887 = vmatprep.subr.bf16.mxu0 %v621
    %888 = vmatpush1.bf16.msra.mxu0 %v620
    %889 = vmatprep.subr.bf16.mxu0 %v623
    %890 = vmatpush1.bf16.msra.mxu0 %v622
    %891 = vmatprep.subr.bf16.mxu0 %v625
    %892 = vmatpush1.bf16.msra.mxu0 %v624
    %893 = vmatprep.subr.bf16.mxu0 %v627
    %894 = vmatpush1.bf16.msra.mxu0 %v626
    %895 = vmatprep.subr.bf16.mxu0 %v629
    %896 = vmatpush1.bf16.msra.mxu0 %v628
    %897 = vmatprep.subr.bf16.mxu0 %v631
    %898 = vmatpush1.bf16.msra.mxu0 %v630
    %899 = vmatprep.subr.bf16.mxu0 %v633
    %900 = vmatpush1.bf16.msra.mxu0 %v632
    %901 = vmatprep.subr.bf16.mxu0 %v635
    %902 = vmatpush1.bf16.msra.mxu0 %v634
    %903 = vmatprep.subr.bf16.mxu0 %v637
    %904 = vmatpush1.bf16.msra.mxu0 %v636
    %905 = vmatprep.subr.bf16.mxu0 %v639
    %906 = vmatpush1.bf16.msra.mxu0 %v638
    %907 = vmatprep.subr.bf16.mxu0 %v641
    %908 = vmatpush1.bf16.msra.mxu0 %v640
    %909 = vmatprep.subr.bf16.mxu0 %v643
    %910 = vmatpush1.bf16.msra.mxu0 %v642
    %911 = vmatprep.subr.bf16.mxu0 %v645
    %912 = vmatpush1.bf16.msra.mxu0 %v644
    %913 = vmatprep.subr.bf16.mxu0 %v647
    %914 = vmatpush1.bf16.msra.mxu0 %v646
    %915 = vmatprep.subr.bf16.mxu0 %v649
    %916 = vmatpush1.bf16.msra.mxu0 %v648
    %917 = vmatprep.mubr.bf16.mxu0 %v67
    %918 = vmatmul.mubr.bf16.gmra.mrb[0].mxu0 %v66
    %v919 = vpop.f32.mrb[0].mxu0
    %v920 = vadd.f32 %v877, %v919
    %v921 = vpop.f32.mrb[0].mxu0
    %v922 = vadd.f32 %v879, %v921
    %v923 = vpop.f32.mrb[0].mxu0
    %v924 = vadd.f32 %v881, %v923
    %v925 = vpop.f32.mrb[0].mxu0
    %v926 = vadd.f32 %v883, %v925
    %927 = vdwg.mxu0
    %928 = vmatprep.subr.bf16.mxu0 %v651
    %929 = vmatpush1.bf16.msra.mxu0 %v650
    %930 = vmatprep.subr.bf16.mxu0 %v653
    %931 = vmatpush1.bf16.msra.mxu0 %v652
    %932 = vmatprep.subr.bf16.mxu0 %v655
    %933 = vmatpush1.bf16.msra.mxu0 %v654
    %934 = vmatprep.subr.bf16.mxu0 %v657
    %935 = vmatpush1.bf16.msra.mxu0 %v656
    %936 = vmatprep.subr.bf16.mxu0 %v659
    %937 = vmatpush1.bf16.msra.mxu0 %v658
    %938 = vmatprep.subr.bf16.mxu0 %v661
    %939 = vmatpush1.bf16.msra.mxu0 %v660
    %940 = vmatprep.subr.bf16.mxu0 %v663
    %941 = vmatpush1.bf16.msra.mxu0 %v662
    %942 = vmatprep.subr.bf16.mxu0 %v665
    %943 = vmatpush1.bf16.msra.mxu0 %v664
    %944 = vmatprep.subr.bf16.mxu0 %v667
    %945 = vmatpush1.bf16.msra.mxu0 %v666
    %946 = vmatprep.subr.bf16.mxu0 %v669
    %947 = vmatpush1.bf16.msra.mxu0 %v668
    %948 = vmatprep.subr.bf16.mxu0 %v671
    %949 = vmatpush1.bf16.msra.mxu0 %v670
    %950 = vmatprep.subr.bf16.mxu0 %v673
    %951 = vmatpush1.bf16.msra.mxu0 %v672
    %952 = vmatprep.subr.bf16.mxu0 %v675
    %953 = vmatpush1.bf16.msra.mxu0 %v674
    %954 = vmatprep.subr.bf16.mxu0 %v677
    %955 = vmatpush1.bf16.msra.mxu0 %v676
    %956 = vmatprep.subr.bf16.mxu0 %v679
    %957 = vmatpush1.bf16.msra.mxu0 %v678
    %958 = vmatprep.subr.bf16.mxu0 %v681
    %959 = vmatpush1.bf16.msra.mxu0 %v680
    %960 = vmatprep.mubr.bf16.mxu0 %v69
    %961 = vmatmul.mubr.bf16.gmra.mrb[0].mxu0 %v68
    %v962 = vpop.f32.mrb[0].mxu0
    %v963 = vadd.f32 %v920, %v962
    %v964 = vpop.f32.mrb[0].mxu0
    %v965 = vadd.f32 %v922, %v964
    %v966 = vpop.f32.mrb[0].mxu0
    %v967 = vadd.f32 %v924, %v966
    %v968 = vpop.f32.mrb[0].mxu0
    %v969 = vadd.f32 %v926, %v968
    %970 = vdwg.mxu0
    %971 = vmatprep.subr.bf16.mxu0 %v683
    %972 = vmatpush1.bf16.msra.mxu0 %v682
    %973 = vmatprep.subr.bf16.mxu0 %v685
    %974 = vmatpush1.bf16.msra.mxu0 %v684
    %975 = vmatprep.subr.bf16.mxu0 %v687
    %976 = vmatpush1.bf16.msra.mxu0 %v686
    %977 = vmatprep.subr.bf16.mxu0 %v689
    %978 = vmatpush1.bf16.msra.mxu0 %v688
    %979 = vmatprep.subr.bf16.mxu0 %v691
    %980 = vmatpush1.bf16.msra.mxu0 %v690
    %981 = vmatprep.subr.bf16.mxu0 %v693
    %982 = vmatpush1.bf16.msra.mxu0 %v692
    %983 = vmatprep.subr.bf16.mxu0 %v695
    %984 = vmatpush1.bf16.msra.mxu0 %v694
    %985 = vmatprep.subr.bf16.mxu0 %v697
    %986 = vmatpush1.bf16.msra.mxu0 %v696
    %987 = vmatprep.subr.bf16.mxu0 %v699
    %988 = vmatpush1.bf16.msra.mxu0 %v698
    %989 = vmatprep.subr.bf16.mxu0 %v701
    %990 = vmatpush1.bf16.msra.mxu0 %v700
    %991 = vmatprep.subr.bf16.mxu0 %v703
    %992 = vmatpush1.bf16.msra.mxu0 %v702
    %993 = vmatprep.subr.bf16.mxu0 %v705
    %994 = vmatpush1.bf16.msra.mxu0 %v704
    %995 = vmatprep.subr.bf16.mxu0 %v707
    %996 = vmatpush1.bf16.msra.mxu0 %v706
    %997 = vmatprep.subr.bf16.mxu0 %v709
    %998 = vmatpush1.bf16.msra.mxu0 %v708
    %999 = vmatprep.subr.bf16.mxu0 %v711
    %1000 = vmatpush1.bf16.msra.mxu0 %v710
    %1001 = vmatprep.subr.bf16.mxu0 %v713
    %1002 = vmatpush1.bf16.msra.mxu0 %v712
    %1003 = vmatprep.mubr.bf16.mxu0 %v71
    %1004 = vmatmul.mubr.bf16.gmra.mrb[0].mxu0 %v70
    %v1005 = vpop.f32.mrb[0].mxu0
    %v1006 = vadd.f32 %v963, %v1005
    %v1007 = vpop.f32.mrb[0].mxu0
    %v1008 = vadd.f32 %v965, %v1007
    %v1009 = vpop.f32.mrb[0].mxu0
    %v1010 = vadd.f32 %v967, %v1009
    %v1011 = vpop.f32.mrb[0].mxu0
    %v1012 = vadd.f32 %v969, %v1011
    %1013 = vdwg.mxu0
    %v1014 = vmax.f32 %v1006, 0.0
    %v1015 = vmax.f32 %v1008, 0.0
    %v1016 = vmax.f32 %v1010, 0.0
    %v1017 = vmax.f32 %v1012, 0.0
    %1018 = vmatprep.subr.mxu0 0.0
    %1019 = vmatpush1.xpose.msra.mxu0 %v1014
    %1020 = vmatprep.subr.mxu0 0.0
    %1021 = vmatpush1.xpose.msra.mxu0 0.0
    %1022 = vmatprep.subr.mxu0 0.0
    %1023 = vmatpush1.xpose.msra.mxu0 0.0
    %1024 = vmatprep.subr.mxu0 0.0
    %1025 = vmatpush1.xpose.msra.mxu0 0.0
    %1026 = vmatprep.subr.mxu0 0.0
    %1027 = vmatpush1.xpose.msra.mxu0 0.0
    %1028 = vmatprep.subr.mxu0 0.0
    %1029 = vmatpush1.xpose.msra.mxu0 0.0
    %1030 = vmatprep.subr.mxu0 0.0
    %1031 = vmatpush1.xpose.msra.mxu0 0.0
    %1032 = vmatprep.subr.mxu0 0.0
    %1033 = vmatpush1.xpose.msra.mxu0 0.0
    %1034 = vmatprep.subr.mxu0 0.0
    %1035 = vmatpush1.xpose.msra.mxu0 0.0
    %1036 = vmatprep.subr.mxu0 0.0
    %1037 = vmatpush1.xpose.msra.mxu0 0.0
    %1038 = vmatprep.subr.mxu0 0.0
    %1039 = vmatpush1.xpose.msra.mxu0 0.0
    %1040 = vmatprep.subr.mxu0 0.0
    %1041 = vmatpush1.xpose.msra.mxu0 0.0
    %1042 = vmatprep.subr.mxu0 0.0
    %1043 = vmatpush1.xpose.msra.mxu0 0.0
    %1044 = vmatprep.subr.mxu0 0.0
    %1045 = vmatpush1.xpose.msra.mxu0 0.0
    %1046 = vmatprep.subr.mxu0 0.0
    %1047 = vmatpush1.xpose.msra.mxu0 0.0
    %1048 = vmatprep.subr.mxu0 0.0
    %1049 = vmatpush1.xpose.msra.mxu0 0.0
    %1050 = vmatprep.subr.mxu0 0.0
    %1051 = vmatpush1.xpose.msra.mxu0 0.0
    %1052 = vmatprep.subr.mxu0 0.0
    %1053 = vmatpush1.xpose.msra.mxu0 0.0
    %1054 = vmatprep.subr.mxu0 0.0
    %1055 = vmatpush1.xpose.msra.mxu0 0.0
    %1056 = vmatprep.subr.mxu0 0.0
    %1057 = vmatpush1.xpose.msra.mxu0 0.0
    %1058 = vmatprep.subr.mxu0 0.0
    %1059 = vmatpush1.xpose.msra.mxu0 0.0
    %1060 = vmatprep.subr.mxu0 0.0
    %1061 = vmatpush1.xpose.msra.mxu0 0.0
    %1062 = vmatprep.subr.mxu0 0.0
    %1063 = vmatpush1.xpose.msra.mxu0 0.0
    %1064 = vmatprep.subr.mxu0 0.0
    %1065 = vmatpush1.xpose.msra.mxu0 0.0
    %1066 = vmatprep.subr.mxu0 0.0
    %1067 = vmatpush1.xpose.msra.mxu0 0.0
    %1068 = vmatprep.subr.mxu0 0.0
    %1069 = vmatpush1.xpose.msra.mxu0 0.0
    %1070 = vmatprep.subr.mxu0 0.0
    %1071 = vmatpush1.xpose.msra.mxu0 0.0
    %1072 = vmatprep.subr.mxu0 0.0
    %1073 = vmatpush1.xpose.msra.mxu0 0.0
    %1074 = vmatprep.subr.mxu0 0.0
    %1075 = vmatpush1.xpose.msra.mxu0 0.0
    %1076 = vmatprep.subr.mxu0 0.0
    %1077 = vmatpush1.xpose.msra.mxu0 0.0
    %1078 = vmatprep.subr.mxu0 0.0
    %1079 = vmatpush1.xpose.msra.mxu0 0.0
    %1080 = vmatprep.subr.mxu0 0.0
    %1081 = vmatpush1.xpose.msra.mxu0 0.0
    %1082 = vmatprep.mubr.f32.mxu0 0.0
    %1083 = vmatmul.mubr.f32.gmra.mrb[0].mxu0 %v1015
    %v1084 = vpop.f32.mrb[0].mxu0
    %v1085 = vadd.f32 0.0, %v1084
    %v1086 = vpop.f32.mrb[0].mxu0
    %1087 = vdwg.mxu0
    %vm1088 = vcmask 64512
    %v1089 = vsel %vm1088, %v1085, inf
    %1090 = vmin.xlane.f32.xlu0 %v1089
    %v1091 = vpop.xlane.xlu0 %1090
    %v1092 = vsub.f32 %v1091, %v1085
    %v1093 = vmul.f32 %v1092, 1.442695
    %v1094 = vpow.pop %v1093
    %v1095 = vsel %vm1088, %v1094, 0.0
    %1096 = vadd.xlane.f32.xlu0 %v1095
    %v1097 = vpop.xlane.xlu0 %1096
    %v1098 = vrcp.pop %v1097
    %v1099 = vmul.f32 %v1094, %v1098
    %v1100 = vstv %s201
    %v1101 = vmul.f32 %v1100, %v1099
    %v1102 = vpack.c.bf16 %v1101, %v1101
    %v1104 = vsel %vm1088, %v200, 0
    %vm1106 = vcmask 1043456
    %v1108 = vsel %vm1106, %v64, 0
    %v1111 = vsel %vm1106, %v65, 0
    %v1114 = vsel %vm1106, %v66, 0
    %v1117 = vsel %vm1106, %v67, 0
    %v1120 = vsel %vm1106, %v68, 0
    %v1123 = vsel %vm1106, %v69, 0
    %v1126 = vsel %vm1106, %v70, 0
    %v1129 = vsel %vm1106, %v71, 0
    %1131 = vmatprep.subr.bf16.mxu0 %v1111
    %1132 = vmatpush1.bf16.msra.mxu0 %v1108
    %1133 = vmatprep.subr.bf16.mxu0 0
    %1134 = vmatpush1.bf16.msra.mxu0 0
    %1135 = vmatprep.subr.bf16.mxu0 0
    %1136 = vmatpush1.bf16.msra.mxu0 0
    %1137 = vmatprep.subr.bf16.mxu0 0
    %1138 = vmatpush1.bf16.msra.mxu0 0
    %1139 = vmatprep.subr.bf16.mxu0 0
    %1140 = vmatpush1.bf16.msra.mxu0 0
    %1141 = vmatprep.subr.bf16.mxu0 0
    %1142 = vmatpush1.bf16.msra.mxu0 0
    %1143 = vmatprep.subr.bf16.mxu0 0
    %1144 = vmatpush1.bf16.msra.mxu0 0
    %1145 = vmatprep.subr.bf16.mxu0 0
    %1146 = vmatpush1.bf16.msra.mxu0 0
    %1147 = vmatprep.subr.bf16.mxu0 0
    %1148 = vmatpush1.bf16.msra.mxu0 0
    %1149 = vmatprep.subr.bf16.mxu0 0
    %1150 = vmatpush1.bf16.msra.mxu0 0
    %1151 = vmatprep.subr.bf16.mxu0 0
    %1152 = vmatpush1.bf16.msra.mxu0 0
    %1153 = vmatprep.subr.bf16.mxu0 0
    %1154 = vmatpush1.bf16.msra.mxu0 0
    %1155 = vmatprep.subr.bf16.mxu0 0
    %1156 = vmatpush1.bf16.msra.mxu0 0
    %1157 = vmatprep.subr.bf16.mxu0 0
    %1158 = vmatpush1.bf16.msra.mxu0 0
    %1159 = vmatprep.subr.bf16.mxu0 0
    %1160 = vmatpush1.bf16.msra.mxu0 0
    %1161 = vmatprep.subr.bf16.mxu0 0
    %1162 = vmatpush1.bf16.msra.mxu0 0
    %1163 = vmatprep.mubr.bf16.mxu0 0
    %1164 = vmatmul.mubr.bf16.gmra.mrb[0].mxu0 %v1104
    %v1165 = vpop.f32.mrb[0].mxu0
    %v1166 = vadd.f32 0.0, %v1165
    %v1167 = vpop.f32.mrb[0].mxu0
    %v1168 = vadd.f32 0.0, %v1167
    %v1169 = vpop.f32.mrb[0].mxu0
    %v1170 = vpop.f32.mrb[0].mxu0
    %1171 = vdwg.mxu0
    %1172 = vmatprep.subr.bf16.mxu0 %v1117
    %1173 = vmatpush1.bf16.msra.mxu0 %v1114
    %1174 = vmatprep.subr.bf16.mxu0 0
    %1175 = vmatpush1.bf16.msra.mxu0 0
    %1176 = vmatprep.subr.bf16.mxu0 0
    %1177 = vmatpush1.bf16.msra.mxu0 0
    %1178 = vmatprep.subr.bf16.mxu0 0
    %1179 = vmatpush1.bf16.msra.mxu0 0
    %1180 = vmatprep.subr.bf16.mxu0 0
    %1181 = vmatpush1.bf16.msra.mxu0 0
    %1182 = vmatprep.subr.bf16.mxu0 0
    %1183 = vmatpush1.bf16.msra.mxu0 0
    %1184 = vmatprep.subr.bf16.mxu0 0
    %1185 = vmatpush1.bf16.msra.mxu0 0
    %1186 = vmatprep.subr.bf16.mxu0 0
    %1187 = vmatpush1.bf16.msra.mxu0 0
    %1188 = vmatprep.subr.bf16.mxu0 0
    %1189 = vmatpush1.bf16.msra.mxu0 0
    %1190 = vmatprep.subr.bf16.mxu0 0
    %1191 = vmatpush1.bf16.msra.mxu0 0
    %1192 = vmatprep.subr.bf16.mxu0 0
    %1193 = vmatpush1.bf16.msra.mxu0 0
    %1194 = vmatprep.subr.bf16.mxu0 0
    %1195 = vmatpush1.bf16.msra.mxu0 0
    %1196 = vmatprep.subr.bf16.mxu0 0
    %1197 = vmatpush1.bf16.msra.mxu0 0
    %1198 = vmatprep.subr.bf16.mxu0 0
    %1199 = vmatpush1.bf16.msra.mxu0 0
    %1200 = vmatprep.subr.bf16.mxu0 0
    %1201 = vmatpush1.bf16.msra.mxu0 0
    %1202 = vmatprep.subr.bf16.mxu0 0
    %1203 = vmatpush1.bf16.msra.mxu0 0
    %1204 = vmatprep.mubr.bf16.mxu0 0
    %1205 = vmatmul.mubr.bf16.gmra.mrb[0].mxu0 %v1104
    %v1206 = vpop.f32.mrb[0].mxu0
    %v1207 = vadd.f32 0.0, %v1206
    %v1208 = vpop.f32.mrb[0].mxu0
    %v1209 = vadd.f32 0.0, %v1208
    %v1210 = vpop.f32.mrb[0].mxu0
    %v1211 = vpop.f32.mrb[0].mxu0
    %1212 = vdwg.mxu0
    %1213 = vmatprep.subr.bf16.mxu0 %v1123
    %1214 = vmatpush1.bf16.msra.mxu0 %v1120
    %1215 = vmatprep.subr.bf16.mxu0 0
    %1216 = vmatpush1.bf16.msra.mxu0 0
    %1217 = vmatprep.subr.bf16.mxu0 0
    %1218 = vmatpush1.bf16.msra.mxu0 0
    %1219 = vmatprep.subr.bf16.mxu0 0
    %1220 = vmatpush1.bf16.msra.mxu0 0
    %1221 = vmatprep.subr.bf16.mxu0 0
    %1222 = vmatpush1.bf16.msra.mxu0 0
    %1223 = vmatprep.subr.bf16.mxu0 0
    %1224 = vmatpush1.bf16.msra.mxu0 0
    %1225 = vmatprep.subr.bf16.mxu0 0
    %1226 = vmatpush1.bf16.msra.mxu0 0
    %1227 = vmatprep.subr.bf16.mxu0 0
    %1228 = vmatpush1.bf16.msra.mxu0 0
    %1229 = vmatprep.subr.bf16.mxu0 0
    %1230 = vmatpush1.bf16.msra.mxu0 0
    %1231 = vmatprep.subr.bf16.mxu0 0
    %1232 = vmatpush1.bf16.msra.mxu0 0
    %1233 = vmatprep.subr.bf16.mxu0 0
    %1234 = vmatpush1.bf16.msra.mxu0 0
    %1235 = vmatprep.subr.bf16.mxu0 0
    %1236 = vmatpush1.bf16.msra.mxu0 0
    %1237 = vmatprep.subr.bf16.mxu0 0
    %1238 = vmatpush1.bf16.msra.mxu0 0
    %1239 = vmatprep.subr.bf16.mxu0 0
    %1240 = vmatpush1.bf16.msra.mxu0 0
    %1241 = vmatprep.subr.bf16.mxu0 0
    %1242 = vmatpush1.bf16.msra.mxu0 0
    %1243 = vmatprep.subr.bf16.mxu0 0
    %1244 = vmatpush1.bf16.msra.mxu0 0
    %1245 = vmatprep.mubr.bf16.mxu0 0
    %1246 = vmatmul.mubr.bf16.gmra.mrb[0].mxu0 %v1104
    %v1247 = vpop.f32.mrb[0].mxu0
    %v1248 = vadd.f32 0.0, %v1247
    %v1249 = vpop.f32.mrb[0].mxu0
    %v1250 = vadd.f32 0.0, %v1249
    %v1251 = vpop.f32.mrb[0].mxu0
    %v1252 = vpop.f32.mrb[0].mxu0
    %1253 = vdwg.mxu0
    %1254 = vmatprep.subr.bf16.mxu0 %v1129
    %1255 = vmatpush1.bf16.msra.mxu0 %v1126
    %1256 = vmatprep.subr.bf16.mxu0 0
    %1257 = vmatpush1.bf16.msra.mxu0 0
    %1258 = vmatprep.subr.bf16.mxu0 0
    %1259 = vmatpush1.bf16.msra.mxu0 0
    %1260 = vmatprep.subr.bf16.mxu0 0
    %1261 = vmatpush1.bf16.msra.mxu0 0
    %1262 = vmatprep.subr.bf16.mxu0 0
    %1263 = vmatpush1.bf16.msra.mxu0 0
    %1264 = vmatprep.subr.bf16.mxu0 0
    %1265 = vmatpush1.bf16.msra.mxu0 0
    %1266 = vmatprep.subr.bf16.mxu0 0
    %1267 = vmatpush1.bf16.msra.mxu0 0
    %1268 = vmatprep.subr.bf16.mxu0 0
    %1269 = vmatpush1.bf16.msra.mxu0 0
    %1270 = vmatprep.subr.bf16.mxu0 0
    %1271 = vmatpush1.bf16.msra.mxu0 0
    %1272 = vmatprep.subr.bf16.mxu0 0
    %1273 = vmatpush1.bf16.msra.mxu0 0
    %1274 = vmatprep.subr.bf16.mxu0 0
    %1275 = vmatpush1.bf16.msra.mxu0 0
    %1276 = vmatprep.subr.bf16.mxu0 0
    %1277 = vmatpush1.bf16.msra.mxu0 0
    %1278 = vmatprep.subr.bf16.mxu0 0
    %1279 = vmatpush1.bf16.msra.mxu0 0
    %1280 = vmatprep.subr.bf16.mxu0 0
    %1281 = vmatpush1.bf16.msra.mxu0 0
    %1282 = vmatprep.subr.bf16.mxu0 0
    %1283 = vmatpush1.bf16.msra.mxu0 0
    %1284 = vmatprep.subr.bf16.mxu0 0
    %1285 = vmatpush1.bf16.msra.mxu0 0
    %1286 = vmatprep.mubr.bf16.mxu0 0
    %1287 = vmatmul.mubr.bf16.gmra.mrb[0].mxu0 %v1104
    %v1288 = vpop.f32.mrb[0].mxu0
    %v1289 = vadd.f32 0.0, %v1288
    %v1290 = vpop.f32.mrb[0].mxu0
    %v1291 = vadd.f32 0.0, %v1290
    %v1292 = vpop.f32.mrb[0].mxu0
    %v1293 = vpop.f32.mrb[0].mxu0
    %1294 = vdwg.mxu0
    %v1295 = vmax.f32 %v1166, 0.0
    %v1296 = vmax.f32 %v1168, 0.0
    %v1297 = vmax.f32 %v1207, 0.0
    %v1298 = vmax.f32 %v1209, 0.0
    %v1299 = vmax.f32 %v1248, 0.0
    %v1300 = vmax.f32 %v1250, 0.0
    %v1301 = vmax.f32 %v1289, 0.0
    %v1302 = vmax.f32 %v1291, 0.0
    %v1303 = vpack.c.bf16 %v1295, %v1295
    %v1304 = vpack.c.bf16 %v1296, %v1296
    %v1305 = vpack.c.bf16 %v1297, %v1297
    %v1306 = vpack.c.bf16 %v1298, %v1298
    %v1307 = vpack.c.bf16 %v1299, %v1299
    %v1308 = vpack.c.bf16 %v1300, %v1300
    %v1309 = vpack.c.bf16 %v1301, %v1301
    %v1310 = vpack.c.bf16 %v1302, %v1302
    %v1312 = vsel %vm1088, %v1102, 0
    %v1315 = vsel %vm1106, %v1303, 0
    %v1318 = vsel %vm1106, %v1304, 0
    %v1321 = vsel %vm1106, %v1305, 0
    %v1324 = vsel %vm1106, %v1306, 0
    %v1327 = vsel %vm1106, %v1307, 0
    %v1330 = vsel %vm1106, %v1308, 0
    %v1333 = vsel %vm1106, %v1309, 0
    %v1336 = vsel %vm1106, %v1310, 0
    %1338 = vmatprep.subr.bf16.mxu0 %v1318
    %1339 = vmatpush1.bf16.msra.mxu0 %v1315
    %1340 = vmatprep.subr.bf16.mxu0 0
    %1341 = vmatpush1.bf16.msra.mxu0 0
    %1342 = vmatprep.subr.bf16.mxu0 0
    %1343 = vmatpush1.bf16.msra.mxu0 0
    %1344 = vmatprep.subr.bf16.mxu0 0
    %1345 = vmatpush1.bf16.msra.mxu0 0
    %1346 = vmatprep.subr.bf16.mxu0 0
    %1347 = vmatpush1.bf16.msra.mxu0 0
    %1348 = vmatprep.subr.bf16.mxu0 0
    %1349 = vmatpush1.bf16.msra.mxu0 0
    %1350 = vmatprep.subr.bf16.mxu0 0
    %1351 = vmatpush1.bf16.msra.mxu0 0
    %1352 = vmatprep.subr.bf16.mxu0 0
    %1353 = vmatpush1.bf16.msra.mxu0 0
    %1354 = vmatprep.subr.bf16.mxu0 0
    %1355 = vmatpush1.bf16.msra.mxu0 0
    %1356 = vmatprep.subr.bf16.mxu0 0
    %1357 = vmatpush1.bf16.msra.mxu0 0
    %1358 = vmatprep.subr.bf16.mxu0 0
    %1359 = vmatpush1.bf16.msra.mxu0 0
    %1360 = vmatprep.subr.bf16.mxu0 0
    %1361 = vmatpush1.bf16.msra.mxu0 0
    %1362 = vmatprep.subr.bf16.mxu0 0
    %1363 = vmatpush1.bf16.msra.mxu0 0
    %1364 = vmatprep.subr.bf16.mxu0 0
    %1365 = vmatpush1.bf16.msra.mxu0 0
    %1366 = vmatprep.subr.bf16.mxu0 0
    %1367 = vmatpush1.bf16.msra.mxu0 0
    %1368 = vmatprep.subr.bf16.mxu0 0
    %1369 = vmatpush1.bf16.msra.mxu0 0
    %1370 = vmatprep.mubr.bf16.mxu0 0
    %1371 = vmatmul.mubr.bf16.gmra.mrb[0].mxu0 %v1312
    %v1372 = vpop.f32.mrb[0].mxu0
    %v1373 = vadd.f32 %v48, %v1372
    %v1374 = vpop.f32.mrb[0].mxu0
    %v1375 = vadd.f32 %v49, %v1374
    %v1376 = vpop.f32.mrb[0].mxu0
    %v1377 = vpop.f32.mrb[0].mxu0
    %1378 = vdwg.mxu0
    %1379 = vmatprep.subr.bf16.mxu0 %v1324
    %1380 = vmatpush1.bf16.msra.mxu0 %v1321
    %1381 = vmatprep.subr.bf16.mxu0 0
    %1382 = vmatpush1.bf16.msra.mxu0 0
    %1383 = vmatprep.subr.bf16.mxu0 0
    %1384 = vmatpush1.bf16.msra.mxu0 0
    %1385 = vmatprep.subr.bf16.mxu0 0
    %1386 = vmatpush1.bf16.msra.mxu0 0
    %1387 = vmatprep.subr.bf16.mxu0 0
    %1388 = vmatpush1.bf16.msra.mxu0 0
    %1389 = vmatprep.subr.bf16.mxu0 0
    %1390 = vmatpush1.bf16.msra.mxu0 0
    %1391 = vmatprep.subr.bf16.mxu0 0
    %1392 = vmatpush1.bf16.msra.mxu0 0
    %1393 = vmatprep.subr.bf16.mxu0 0
    %1394 = vmatpush1.bf16.msra.mxu0 0
    %1395 = vmatprep.subr.bf16.mxu0 0
    %1396 = vmatpush1.bf16.msra.mxu0 0
    %1397 = vmatprep.subr.bf16.mxu0 0
    %1398 = vmatpush1.bf16.msra.mxu0 0
    %1399 = vmatprep.subr.bf16.mxu0 0
    %1400 = vmatpush1.bf16.msra.mxu0 0
    %1401 = vmatprep.subr.bf16.mxu0 0
    %1402 = vmatpush1.bf16.msra.mxu0 0
    %1403 = vmatprep.subr.bf16.mxu0 0
    %1404 = vmatpush1.bf16.msra.mxu0 0
    %1405 = vmatprep.subr.bf16.mxu0 0
    %1406 = vmatpush1.bf16.msra.mxu0 0
    %1407 = vmatprep.subr.bf16.mxu0 0
    %1408 = vmatpush1.bf16.msra.mxu0 0
    %1409 = vmatprep.subr.bf16.mxu0 0
    %1410 = vmatpush1.bf16.msra.mxu0 0
    %1411 = vmatprep.mubr.bf16.mxu0 0
    %1412 = vmatmul.mubr.bf16.gmra.mrb[0].mxu0 %v1312
    %v1413 = vpop.f32.mrb[0].mxu0
    %v1414 = vadd.f32 %v50, %v1413
    %v1415 = vpop.f32.mrb[0].mxu0
    %v1416 = vadd.f32 %v51, %v1415
    %v1417 = vpop.f32.mrb[0].mxu0
    %v1418 = vpop.f32.mrb[0].mxu0
    %1419 = vdwg.mxu0
    %1420 = vmatprep.subr.bf16.mxu0 %v1330
    %1421 = vmatpush1.bf16.msra.mxu0 %v1327
    %1422 = vmatprep.subr.bf16.mxu0 0
    %1423 = vmatpush1.bf16.msra.mxu0 0
    %1424 = vmatprep.subr.bf16.mxu0 0
    %1425 = vmatpush1.bf16.msra.mxu0 0
    %1426 = vmatprep.subr.bf16.mxu0 0
    %1427 = vmatpush1.bf16.msra.mxu0 0
    %1428 = vmatprep.subr.bf16.mxu0 0
    %1429 = vmatpush1.bf16.msra.mxu0 0
    %1430 = vmatprep.subr.bf16.mxu0 0
    %1431 = vmatpush1.bf16.msra.mxu0 0
    %1432 = vmatprep.subr.bf16.mxu0 0
    %1433 = vmatpush1.bf16.msra.mxu0 0
    %1434 = vmatprep.subr.bf16.mxu0 0
    %1435 = vmatpush1.bf16.msra.mxu0 0
    %1436 = vmatprep.subr.bf16.mxu0 0
    %1437 = vmatpush1.bf16.msra.mxu0 0
    %1438 = vmatprep.subr.bf16.mxu0 0
    %1439 = vmatpush1.bf16.msra.mxu0 0
    %1440 = vmatprep.subr.bf16.mxu0 0
    %1441 = vmatpush1.bf16.msra.mxu0 0
    %1442 = vmatprep.subr.bf16.mxu0 0
    %1443 = vmatpush1.bf16.msra.mxu0 0
    %1444 = vmatprep.subr.bf16.mxu0 0
    %1445 = vmatpush1.bf16.msra.mxu0 0
    %1446 = vmatprep.subr.bf16.mxu0 0
    %1447 = vmatpush1.bf16.msra.mxu0 0
    %1448 = vmatprep.subr.bf16.mxu0 0
    %1449 = vmatpush1.bf16.msra.mxu0 0
    %1450 = vmatprep.subr.bf16.mxu0 0
    %1451 = vmatpush1.bf16.msra.mxu0 0
    %1452 = vmatprep.mubr.bf16.mxu0 0
    %1453 = vmatmul.mubr.bf16.gmra.mrb[0].mxu0 %v1312
    %v1454 = vpop.f32.mrb[0].mxu0
    %v1455 = vadd.f32 %v52, %v1454
    %v1456 = vpop.f32.mrb[0].mxu0
    %v1457 = vadd.f32 %v53, %v1456
    %v1458 = vpop.f32.mrb[0].mxu0
    %v1459 = vpop.f32.mrb[0].mxu0
    %1460 = vdwg.mxu0
    %1461 = vmatprep.subr.bf16.mxu0 %v1336
    %1462 = vmatpush1.bf16.msra.mxu0 %v1333
    %1463 = vmatprep.subr.bf16.mxu0 0
    %1464 = vmatpush1.bf16.msra.mxu0 0
    %1465 = vmatprep.subr.bf16.mxu0 0
    %1466 = vmatpush1.bf16.msra.mxu0 0
    %1467 = vmatprep.subr.bf16.mxu0 0
    %1468 = vmatpush1.bf16.msra.mxu0 0
    %1469 = vmatprep.subr.bf16.mxu0 0
    %1470 = vmatpush1.bf16.msra.mxu0 0
    %1471 = vmatprep.subr.bf16.mxu0 0
    %1472 = vmatpush1.bf16.msra.mxu0 0
    %1473 = vmatprep.subr.bf16.mxu0 0
    %1474 = vmatpush1.bf16.msra.mxu0 0
    %1475 = vmatprep.subr.bf16.mxu0 0
    %1476 = vmatpush1.bf16.msra.mxu0 0
    %1477 = vmatprep.subr.bf16.mxu0 0
    %1478 = vmatpush1.bf16.msra.mxu0 0
    %1479 = vmatprep.subr.bf16.mxu0 0
    %1480 = vmatpush1.bf16.msra.mxu0 0
    %1481 = vmatprep.subr.bf16.mxu0 0
    %1482 = vmatpush1.bf16.msra.mxu0 0
    %1483 = vmatprep.subr.bf16.mxu0 0
    %1484 = vmatpush1.bf16.msra.mxu0 0
    %1485 = vmatprep.subr.bf16.mxu0 0
    %1486 = vmatpush1.bf16.msra.mxu0 0
    %1487 = vmatprep.subr.bf16.mxu0 0
    %1488 = vmatpush1.bf16.msra.mxu0 0
    %1489 = vmatprep.subr.bf16.mxu0 0
    %1490 = vmatpush1.bf16.msra.mxu0 0
    %1491 = vmatprep.subr.bf16.mxu0 0
    %1492 = vmatpush1.bf16.msra.mxu0 0
    %1493 = vmatprep.mubr.bf16.mxu0 0
    %1494 = vmatmul.mubr.bf16.gmra.mrb[0].mxu0 %v1312
    %v1495 = vpop.f32.mrb[0].mxu0
    %v1496 = vadd.f32 %v54, %v1495
    %v1497 = vpop.f32.mrb[0].mxu0
    %v1498 = vadd.f32 %v55, %v1497
    %v1499 = vpop.f32.mrb[0].mxu0
    %v1500 = vpop.f32.mrb[0].mxu0
    %1501 = vdwg.mxu0
    %1502 = vst [vmem:[#allocation8] sm:$0xff] %v1373
    %1503 = vst [vmem:[#allocation8 + $0x8] sm:$0xff] %v1375
    %1504 = vst [vmem:[#allocation8 + $0x10] sm:$0xff] %v1414
    %1505 = vst [vmem:[#allocation8 + $0x18] sm:$0xff] %v1416
    %1506 = vst [vmem:[#allocation8 + $0x20] sm:$0xff] %v1455
    %1507 = vst [vmem:[#allocation8 + $0x28] sm:$0xff] %v1457
    %1508 = vst [vmem:[#allocation8 + $0x30] sm:$0xff] %v1496
    %1509 = vst [vmem:[#allocation8 + $0x38] sm:$0xff] %v1498
    %1510 = vmatprep.subr.mxu0 0.0
    %1511 = vmatpush1.xpose.msra.mxu0 %v1016
    %1512 = vmatprep.subr.mxu0 0.0
    %1513 = vmatpush1.xpose.msra.mxu0 0.0
    %1514 = vmatprep.subr.mxu0 0.0
    %1515 = vmatpush1.xpose.msra.mxu0 0.0
    %1516 = vmatprep.subr.mxu0 0.0
    %1517 = vmatpush1.xpose.msra.mxu0 0.0
    %1518 = vmatprep.subr.mxu0 0.0
    %1519 = vmatpush1.xpose.msra.mxu0 0.0
    %1520 = vmatprep.subr.mxu0 0.0
    %1521 = vmatpush1.xpose.msra.mxu0 0.0
    %1522 = vmatprep.subr.mxu0 0.0
    %1523 = vmatpush1.xpose.msra.mxu0 0.0
    %1524 = vmatprep.subr.mxu0 0.0
    %1525 = vmatpush1.xpose.msra.mxu0 0.0
    %1526 = vmatprep.subr.mxu0 0.0
    %1527 = vmatpush1.xpose.msra.mxu0 0.0
    %1528 = vmatprep.subr.mxu0 0.0
    %1529 = vmatpush1.xpose.msra.mxu0 0.0
    %1530 = vmatprep.subr.mxu0 0.0
    %1531 = vmatpush1.xpose.msra.mxu0 0.0
    %1532 = vmatprep.subr.mxu0 0.0
    %1533 = vmatpush1.xpose.msra.mxu0 0.0
    %1534 = vmatprep.subr.mxu0 0.0
    %1535 = vmatpush1.xpose.msra.mxu0 0.0
    %1536 = vmatprep.subr.mxu0 0.0
    %1537 = vmatpush1.xpose.msra.mxu0 0.0
    %1538 = vmatprep.subr.mxu0 0.0
    %1539 = vmatpush1.xpose.msra.mxu0 0.0
    %1540 = vmatprep.subr.mxu0 0.0
    %1541 = vmatpush1.xpose.msra.mxu0 0.0
    %1542 = vmatprep.subr.mxu0 0.0
    %1543 = vmatpush1.xpose.msra.mxu0 0.0
    %1544 = vmatprep.subr.mxu0 0.0
    %1545 = vmatpush1.xpose.msra.mxu0 0.0
    %1546 = vmatprep.subr.mxu0 0.0
    %1547 = vmatpush1.xpose.msra.mxu0 0.0
    %1548 = vmatprep.subr.mxu0 0.0
    %1549 = vmatpush1.xpose.msra.mxu0 0.0
    %1550 = vmatprep.subr.mxu0 0.0
    %1551 = vmatpush1.xpose.msra.mxu0 0.0
    %1552 = vmatprep.subr.mxu0 0.0
    %1553 = vmatpush1.xpose.msra.mxu0 0.0
    %1554 = vmatprep.subr.mxu0 0.0
    %1555 = vmatpush1.xpose.msra.mxu0 0.0
    %1556 = vmatprep.subr.mxu0 0.0
    %1557 = vmatpush1.xpose.msra.mxu0 0.0
    %1558 = vmatprep.subr.mxu0 0.0
    %1559 = vmatpush1.xpose.msra.mxu0 0.0
    %1560 = vmatprep.subr.mxu0 0.0
    %1561 = vmatpush1.xpose.msra.mxu0 0.0
    %1562 = vmatprep.subr.mxu0 0.0
    %1563 = vmatpush1.xpose.msra.mxu0 0.0
    %1564 = vmatprep.subr.mxu0 0.0
    %1565 = vmatpush1.xpose.msra.mxu0 0.0
    %1566 = vmatprep.subr.mxu0 0.0
    %1567 = vmatpush1.xpose.msra.mxu0 0.0
    %1568 = vmatprep.subr.mxu0 0.0
    %1569 = vmatpush1.xpose.msra.mxu0 0.0
    %1570 = vmatprep.subr.mxu0 0.0
    %1571 = vmatpush1.xpose.msra.mxu0 0.0
    %1572 = vmatprep.subr.mxu0 0.0
    %1573 = vmatpush1.xpose.msra.mxu0 0.0
    %1574 = vmatprep.mubr.f32.mxu0 0.0
    %1575 = vmatmul.mubr.f32.gmra.mrb[0].mxu0 %v1017
    %v1576 = vpop.f32.mrb[0].mxu0
    %v1577 = vadd.f32 0.0, %v1576
    %v1578 = vpop.f32.mrb[0].mxu0
    %1579 = vdwg.mxu0
    %v1580 = vsel %vm1088, %v1577, inf
    %1581 = vmin.xlane.f32.xlu0 %v1580
    %v1582 = vpop.xlane.xlu0 %1581
    %v1583 = vsub.f32 %v1582, %v1577
    %v1584 = vmul.f32 %v1583, 1.442695
    %v1585 = vpow.pop %v1584
    %v1586 = vsel %vm1088, %v1585, 0.0
    %1587 = vadd.xlane.f32.xlu0 %v1586
    %v1588 = vpop.xlane.xlu0 %1587
    %v1589 = vrcp.pop %v1588
    %v1590 = vmul.f32 %v1585, %v1589
    %v1591 = vmul.f32 %v1100, %v1590
    %v1592 = vpack.c.bf16 %v1591, %v1591
    %v1601 = vrot.slane %v64, 4
    %v1602 = vrot.slane %v65, 4
    %v1603 = vrot.slane %v66, 4
    %v1604 = vrot.slane %v67, 4
    %v1605 = vrot.slane %v68, 4
    %v1606 = vrot.slane %v69, 4
    %v1607 = vrot.slane %v70, 4
    %v1608 = vrot.slane %v71, 4
    %v1610 = vsel %vm1106, %v1601, 0
    %v1613 = vsel %vm1106, %v1602, 0
    %v1616 = vsel %vm1106, %v1603, 0
    %v1619 = vsel %vm1106, %v1604, 0
    %v1622 = vsel %vm1106, %v1605, 0
    %v1625 = vsel %vm1106, %v1606, 0
    %v1628 = vsel %vm1106, %v1607, 0
    %v1631 = vsel %vm1106, %v1608, 0
    %1633 = vmatprep.subr.bf16.mxu0 %v1613
    %1634 = vmatpush1.bf16.msra.mxu0 %v1610
    %1635 = vmatprep.subr.bf16.mxu0 0
    %1636 = vmatpush1.bf16.msra.mxu0 0
    %1637 = vmatprep.subr.bf16.mxu0 0
    %1638 = vmatpush1.bf16.msra.mxu0 0
    %1639 = vmatprep.subr.bf16.mxu0 0
    %1640 = vmatpush1.bf16.msra.mxu0 0
    %1641 = vmatprep.subr.bf16.mxu0 0
    %1642 = vmatpush1.bf16.msra.mxu0 0
    %1643 = vmatprep.subr.bf16.mxu0 0
    %1644 = vmatpush1.bf16.msra.mxu0 0
    %1645 = vmatprep.subr.bf16.mxu0 0
    %1646 = vmatpush1.bf16.msra.mxu0 0
    %1647 = vmatprep.subr.bf16.mxu0 0
    %1648 = vmatpush1.bf16.msra.mxu0 0
    %1649 = vmatprep.subr.bf16.mxu0 0
    %1650 = vmatpush1.bf16.msra.mxu0 0
    %1651 = vmatprep.subr.bf16.mxu0 0
    %1652 = vmatpush1.bf16.msra.mxu0 0
    %1653 = vmatprep.subr.bf16.mxu0 0
    %1654 = vmatpush1.bf16.msra.mxu0 0
    %1655 = vmatprep.subr.bf16.mxu0 0
    %1656 = vmatpush1.bf16.msra.mxu0 0
    %1657 = vmatprep.subr.bf16.mxu0 0
    %1658 = vmatpush1.bf16.msra.mxu0 0
    %1659 = vmatprep.subr.bf16.mxu0 0
    %1660 = vmatpush1.bf16.msra.mxu0 0
    %1661 = vmatprep.subr.bf16.mxu0 0
    %1662 = vmatpush1.bf16.msra.mxu0 0
    %1663 = vmatprep.subr.bf16.mxu0 0
    %1664 = vmatpush1.bf16.msra.mxu0 0
    %1665 = vmatprep.mubr.bf16.mxu0 0
    %1666 = vmatmul.mubr.bf16.gmra.mrb[0].mxu0 %v1104
    %v1667 = vpop.f32.mrb[0].mxu0
    %v1668 = vadd.f32 0.0, %v1667
    %v1669 = vpop.f32.mrb[0].mxu0
    %v1670 = vadd.f32 0.0, %v1669
    %v1671 = vpop.f32.mrb[0].mxu0
    %v1672 = vpop.f32.mrb[0].mxu0
    %1673 = vdwg.mxu0
    %1674 = vmatprep.subr.bf16.mxu0 %v1619
    %1675 = vmatpush1.bf16.msra.mxu0 %v1616
    %1676 = vmatprep.subr.bf16.mxu0 0
    %1677 = vmatpush1.bf16.msra.mxu0 0
    %1678 = vmatprep.subr.bf16.mxu0 0
    %1679 = vmatpush1.bf16.msra.mxu0 0
    %1680 = vmatprep.subr.bf16.mxu0 0
    %1681 = vmatpush1.bf16.msra.mxu0 0
    %1682 = vmatprep.subr.bf16.mxu0 0
    %1683 = vmatpush1.bf16.msra.mxu0 0
    %1684 = vmatprep.subr.bf16.mxu0 0
    %1685 = vmatpush1.bf16.msra.mxu0 0
    %1686 = vmatprep.subr.bf16.mxu0 0
    %1687 = vmatpush1.bf16.msra.mxu0 0
    %1688 = vmatprep.subr.bf16.mxu0 0
    %1689 = vmatpush1.bf16.msra.mxu0 0
    %1690 = vmatprep.subr.bf16.mxu0 0
    %1691 = vmatpush1.bf16.msra.mxu0 0
    %1692 = vmatprep.subr.bf16.mxu0 0
    %1693 = vmatpush1.bf16.msra.mxu0 0
    %1694 = vmatprep.subr.bf16.mxu0 0
    %1695 = vmatpush1.bf16.msra.mxu0 0
    %1696 = vmatprep.subr.bf16.mxu0 0
    %1697 = vmatpush1.bf16.msra.mxu0 0
    %1698 = vmatprep.subr.bf16.mxu0 0
    %1699 = vmatpush1.bf16.msra.mxu0 0
    %1700 = vmatprep.subr.bf16.mxu0 0
    %1701 = vmatpush1.bf16.msra.mxu0 0
    %1702 = vmatprep.subr.bf16.mxu0 0
    %1703 = vmatpush1.bf16.msra.mxu0 0
    %1704 = vmatprep.subr.bf16.mxu0 0
    %1705 = vmatpush1.bf16.msra.mxu0 0
    %1706 = vmatprep.mubr.bf16.mxu0 0
    %1707 = vmatmul.mubr.bf16.gmra.mrb[0].mxu0 %v1104
    %v1708 = vpop.f32.mrb[0].mxu0
    %v1709 = vadd.f32 0.0, %v1708
    %v1710 = vpop.f32.mrb[0].mxu0
    %v1711 = vadd.f32 0.0, %v1710
    %v1712 = vpop.f32.mrb[0].mxu0
    %v1713 = vpop.f32.mrb[0].mxu0
    %1714 = vdwg.mxu0
    %1715 = vmatprep.subr.bf16.mxu0 %v1625
    %1716 = vmatpush1.bf16.msra.mxu0 %v1622
    %1717 = vmatprep.subr.bf16.mxu0 0
    %1718 = vmatpush1.bf16.msra.mxu0 0
    %1719 = vmatprep.subr.bf16.mxu0 0
    %1720 = vmatpush1.bf16.msra.mxu0 0
    %1721 = vmatprep.subr.bf16.mxu0 0
    %1722 = vmatpush1.bf16.msra.mxu0 0
    %1723 = vmatprep.subr.bf16.mxu0 0
    %1724 = vmatpush1.bf16.msra.mxu0 0
    %1725 = vmatprep.subr.bf16.mxu0 0
    %1726 = vmatpush1.bf16.msra.mxu0 0
    %1727 = vmatprep.subr.bf16.mxu0 0
    %1728 = vmatpush1.bf16.msra.mxu0 0
    %1729 = vmatprep.subr.bf16.mxu0 0
    %1730 = vmatpush1.bf16.msra.mxu0 0
    %1731 = vmatprep.subr.bf16.mxu0 0
    %1732 = vmatpush1.bf16.msra.mxu0 0
    %1733 = vmatprep.subr.bf16.mxu0 0
    %1734 = vmatpush1.bf16.msra.mxu0 0
    %1735 = vmatprep.subr.bf16.mxu0 0
    %1736 = vmatpush1.bf16.msra.mxu0 0
    %1737 = vmatprep.subr.bf16.mxu0 0
    %1738 = vmatpush1.bf16.msra.mxu0 0
    %1739 = vmatprep.subr.bf16.mxu0 0
    %1740 = vmatpush1.bf16.msra.mxu0 0
    %1741 = vmatprep.subr.bf16.mxu0 0
    %1742 = vmatpush1.bf16.msra.mxu0 0
    %1743 = vmatprep.subr.bf16.mxu0 0
    %1744 = vmatpush1.bf16.msra.mxu0 0
    %1745 = vmatprep.subr.bf16.mxu0 0
    %1746 = vmatpush1.bf16.msra.mxu0 0
    %1747 = vmatprep.mubr.bf16.mxu0 0
    %1748 = vmatmul.mubr.bf16.gmra.mrb[0].mxu0 %v1104
    %v1749 = vpop.f32.mrb[0].mxu0
    %v1750 = vadd.f32 0.0, %v1749
    %v1751 = vpop.f32.mrb[0].mxu0
    %v1752 = vadd.f32 0.0, %v1751
    %v1753 = vpop.f32.mrb[0].mxu0
    %v1754 = vpop.f32.mrb[0].mxu0
    %1755 = vdwg.mxu0
    %1756 = vmatprep.subr.bf16.mxu0 %v1631
    %1757 = vmatpush1.bf16.msra.mxu0 %v1628
    %1758 = vmatprep.subr.bf16.mxu0 0
    %1759 = vmatpush1.bf16.msra.mxu0 0
    %1760 = vmatprep.subr.bf16.mxu0 0
    %1761 = vmatpush1.bf16.msra.mxu0 0
    %1762 = vmatprep.subr.bf16.mxu0 0
    %1763 = vmatpush1.bf16.msra.mxu0 0
    %1764 = vmatprep.subr.bf16.mxu0 0
    %1765 = vmatpush1.bf16.msra.mxu0 0
    %1766 = vmatprep.subr.bf16.mxu0 0
    %1767 = vmatpush1.bf16.msra.mxu0 0
    %1768 = vmatprep.subr.bf16.mxu0 0
    %1769 = vmatpush1.bf16.msra.mxu0 0
    %1770 = vmatprep.subr.bf16.mxu0 0
    %1771 = vmatpush1.bf16.msra.mxu0 0
    %1772 = vmatprep.subr.bf16.mxu0 0
    %1773 = vmatpush1.bf16.msra.mxu0 0
    %1774 = vmatprep.subr.bf16.mxu0 0
    %1775 = vmatpush1.bf16.msra.mxu0 0
    %1776 = vmatprep.subr.bf16.mxu0 0
    %1777 = vmatpush1.bf16.msra.mxu0 0
    %1778 = vmatprep.subr.bf16.mxu0 0
    %1779 = vmatpush1.bf16.msra.mxu0 0
    %1780 = vmatprep.subr.bf16.mxu0 0
    %1781 = vmatpush1.bf16.msra.mxu0 0
    %1782 = vmatprep.subr.bf16.mxu0 0
    %1783 = vmatpush1.bf16.msra.mxu0 0
    %1784 = vmatprep.subr.bf16.mxu0 0
    %1785 = vmatpush1.bf16.msra.mxu0 0
    %1786 = vmatprep.subr.bf16.mxu0 0
    %1787 = vmatpush1.bf16.msra.mxu0 0
    %1788 = vmatprep.mubr.bf16.mxu0 0
    %1789 = vmatmul.mubr.bf16.gmra.mrb[0].mxu0 %v1104
    %v1790 = vpop.f32.mrb[0].mxu0
    %v1791 = vadd.f32 0.0, %v1790
    %v1792 = vpop.f32.mrb[0].mxu0
    %v1793 = vadd.f32 0.0, %v1792
    %v1794 = vpop.f32.mrb[0].mxu0
    %v1795 = vpop.f32.mrb[0].mxu0
    %1796 = vdwg.mxu0
    %v1797 = vmax.f32 %v1668, 0.0
    %v1798 = vmax.f32 %v1670, 0.0
    %v1799 = vmax.f32 %v1709, 0.0
    %v1800 = vmax.f32 %v1711, 0.0
    %v1801 = vmax.f32 %v1750, 0.0
    %v1802 = vmax.f32 %v1752, 0.0
    %v1803 = vmax.f32 %v1791, 0.0
    %v1804 = vmax.f32 %v1793, 0.0
    %v1805 = vpack.c.bf16 %v1797, %v1797
    %v1806 = vpack.c.bf16 %v1798, %v1798
    %v1807 = vpack.c.bf16 %v1799, %v1799
    %v1808 = vpack.c.bf16 %v1800, %v1800
    %v1809 = vpack.c.bf16 %v1801, %v1801
    %v1810 = vpack.c.bf16 %v1802, %v1802
    %v1811 = vpack.c.bf16 %v1803, %v1803
    %v1812 = vpack.c.bf16 %v1804, %v1804
    %v1814 = vsel %vm1088, %v1592, 0
    %v1817 = vsel %vm1106, %v1805, 0
    %v1820 = vsel %vm1106, %v1806, 0
    %v1823 = vsel %vm1106, %v1807, 0
    %v1826 = vsel %vm1106, %v1808, 0
    %v1829 = vsel %vm1106, %v1809, 0
    %v1832 = vsel %vm1106, %v1810, 0
    %v1835 = vsel %vm1106, %v1811, 0
    %v1838 = vsel %vm1106, %v1812, 0
    %1840 = vmatprep.subr.bf16.mxu0 %v1820
    %1841 = vmatpush1.bf16.msra.mxu0 %v1817
    %1842 = vmatprep.subr.bf16.mxu0 0
    %1843 = vmatpush1.bf16.msra.mxu0 0
    %1844 = vmatprep.subr.bf16.mxu0 0
    %1845 = vmatpush1.bf16.msra.mxu0 0
    %1846 = vmatprep.subr.bf16.mxu0 0
    %1847 = vmatpush1.bf16.msra.mxu0 0
    %1848 = vmatprep.subr.bf16.mxu0 0
    %1849 = vmatpush1.bf16.msra.mxu0 0
    %1850 = vmatprep.subr.bf16.mxu0 0
    %1851 = vmatpush1.bf16.msra.mxu0 0
    %1852 = vmatprep.subr.bf16.mxu0 0
    %1853 = vmatpush1.bf16.msra.mxu0 0
    %1854 = vmatprep.subr.bf16.mxu0 0
    %1855 = vmatpush1.bf16.msra.mxu0 0
    %1856 = vmatprep.subr.bf16.mxu0 0
    %1857 = vmatpush1.bf16.msra.mxu0 0
    %1858 = vmatprep.subr.bf16.mxu0 0
    %1859 = vmatpush1.bf16.msra.mxu0 0
    %1860 = vmatprep.subr.bf16.mxu0 0
    %1861 = vmatpush1.bf16.msra.mxu0 0
    %1862 = vmatprep.subr.bf16.mxu0 0
    %1863 = vmatpush1.bf16.msra.mxu0 0
    %1864 = vmatprep.subr.bf16.mxu0 0
    %1865 = vmatpush1.bf16.msra.mxu0 0
    %1866 = vmatprep.subr.bf16.mxu0 0
    %1867 = vmatpush1.bf16.msra.mxu0 0
    %1868 = vmatprep.subr.bf16.mxu0 0
    %1869 = vmatpush1.bf16.msra.mxu0 0
    %1870 = vmatprep.subr.bf16.mxu0 0
    %1871 = vmatpush1.bf16.msra.mxu0 0
    %1872 = vmatprep.mubr.bf16.mxu0 0
    %1873 = vmatmul.mubr.bf16.gmra.mrb[0].mxu0 %v1814
    %v1874 = vpop.f32.mrb[0].mxu0
    %v1875 = vadd.f32 %v56, %v1874
    %v1876 = vpop.f32.mrb[0].mxu0
    %v1877 = vadd.f32 %v57, %v1876
    %v1878 = vpop.f32.mrb[0].mxu0
    %v1879 = vpop.f32.mrb[0].mxu0
    %1880 = vdwg.mxu0
    %1881 = vmatprep.subr.bf16.mxu0 %v1826
    %1882 = vmatpush1.bf16.msra.mxu0 %v1823
    %1883 = vmatprep.subr.bf16.mxu0 0
    %1884 = vmatpush1.bf16.msra.mxu0 0
    %1885 = vmatprep.subr.bf16.mxu0 0
    %1886 = vmatpush1.bf16.msra.mxu0 0
    %1887 = vmatprep.subr.bf16.mxu0 0
    %1888 = vmatpush1.bf16.msra.mxu0 0
    %1889 = vmatprep.subr.bf16.mxu0 0
    %1890 = vmatpush1.bf16.msra.mxu0 0
    %1891 = vmatprep.subr.bf16.mxu0 0
    %1892 = vmatpush1.bf16.msra.mxu0 0
    %1893 = vmatprep.subr.bf16.mxu0 0
    %1894 = vmatpush1.bf16.msra.mxu0 0
    %1895 = vmatprep.subr.bf16.mxu0 0
    %1896 = vmatpush1.bf16.msra.mxu0 0
    %1897 = vmatprep.subr.bf16.mxu0 0
    %1898 = vmatpush1.bf16.msra.mxu0 0
    %1899 = vmatprep.subr.bf16.mxu0 0
    %1900 = vmatpush1.bf16.msra.mxu0 0
    %1901 = vmatprep.subr.bf16.mxu0 0
    %1902 = vmatpush1.bf16.msra.mxu0 0
    %1903 = vmatprep.subr.bf16.mxu0 0
    %1904 = vmatpush1.bf16.msra.mxu0 0
    %1905 = vmatprep.subr.bf16.mxu0 0
    %1906 = vmatpush1.bf16.msra.mxu0 0
    %1907 = vmatprep.subr.bf16.mxu0 0
    %1908 = vmatpush1.bf16.msra.mxu0 0
    %1909 = vmatprep.subr.bf16.mxu0 0
    %1910 = vmatpush1.bf16.msra.mxu0 0
    %1911 = vmatprep.subr.bf16.mxu0 0
    %1912 = vmatpush1.bf16.msra.mxu0 0
    %1913 = vmatprep.mubr.bf16.mxu0 0
    %1914 = vmatmul.mubr.bf16.gmra.mrb[0].mxu0 %v1814
    %v1915 = vpop.f32.mrb[0].mxu0
    %v1916 = vadd.f32 %v58, %v1915
    %v1917 = vpop.f32.mrb[0].mxu0
    %v1918 = vadd.f32 %v59, %v1917
    %v1919 = vpop.f32.mrb[0].mxu0
    %v1920 = vpop.f32.mrb[0].mxu0
    %1921 = vdwg.mxu0
    %1922 = vmatprep.subr.bf16.mxu0 %v1832
    %1923 = vmatpush1.bf16.msra.mxu0 %v1829
    %1924 = vmatprep.subr.bf16.mxu0 0
    %1925 = vmatpush1.bf16.msra.mxu0 0
    %1926 = vmatprep.subr.bf16.mxu0 0
    %1927 = vmatpush1.bf16.msra.mxu0 0
    %1928 = vmatprep.subr.bf16.mxu0 0
    %1929 = vmatpush1.bf16.msra.mxu0 0
    %1930 = vmatprep.subr.bf16.mxu0 0
    %1931 = vmatpush1.bf16.msra.mxu0 0
    %1932 = vmatprep.subr.bf16.mxu0 0
    %1933 = vmatpush1.bf16.msra.mxu0 0
    %1934 = vmatprep.subr.bf16.mxu0 0
    %1935 = vmatpush1.bf16.msra.mxu0 0
    %1936 = vmatprep.subr.bf16.mxu0 0
    %1937 = vmatpush1.bf16.msra.mxu0 0
    %1938 = vmatprep.subr.bf16.mxu0 0
    %1939 = vmatpush1.bf16.msra.mxu0 0
    %1940 = vmatprep.subr.bf16.mxu0 0
    %1941 = vmatpush1.bf16.msra.mxu0 0
    %1942 = vmatprep.subr.bf16.mxu0 0
    %1943 = vmatpush1.bf16.msra.mxu0 0
    %1944 = vmatprep.subr.bf16.mxu0 0
    %1945 = vmatpush1.bf16.msra.mxu0 0
    %1946 = vmatprep.subr.bf16.mxu0 0
    %1947 = vmatpush1.bf16.msra.mxu0 0
    %1948 = vmatprep.subr.bf16.mxu0 0
    %1949 = vmatpush1.bf16.msra.mxu0 0
    %1950 = vmatprep.subr.bf16.mxu0 0
    %1951 = vmatpush1.bf16.msra.mxu0 0
    %1952 = vmatprep.subr.bf16.mxu0 0
    %1953 = vmatpush1.bf16.msra.mxu0 0
    %1954 = vmatprep.mubr.bf16.mxu0 0
    %1955 = vmatmul.mubr.bf16.gmra.mrb[0].mxu0 %v1814
    %v1956 = vpop.f32.mrb[0].mxu0
    %v1957 = vadd.f32 %v60, %v1956
    %v1958 = vpop.f32.mrb[0].mxu0
    %v1959 = vadd.f32 %v61, %v1958
    %v1960 = vpop.f32.mrb[0].mxu0
    %v1961 = vpop.f32.mrb[0].mxu0
    %1962 = vdwg.mxu0
    %1963 = vmatprep.subr.bf16.mxu0 %v1838
    %1964 = vmatpush1.bf16.msra.mxu0 %v1835
    %1965 = vmatprep.subr.bf16.mxu0 0
    %1966 = vmatpush1.bf16.msra.mxu0 0
    %1967 = vmatprep.subr.bf16.mxu0 0
    %1968 = vmatpush1.bf16.msra.mxu0 0
    %1969 = vmatprep.subr.bf16.mxu0 0
    %1970 = vmatpush1.bf16.msra.mxu0 0
    %1971 = vmatprep.subr.bf16.mxu0 0
    %1972 = vmatpush1.bf16.msra.mxu0 0
    %1973 = vmatprep.subr.bf16.mxu0 0
    %1974 = vmatpush1.bf16.msra.mxu0 0
    %1975 = vmatprep.subr.bf16.mxu0 0
    %1976 = vmatpush1.bf16.msra.mxu0 0
    %1977 = vmatprep.subr.bf16.mxu0 0
    %1978 = vmatpush1.bf16.msra.mxu0 0
    %1979 = vmatprep.subr.bf16.mxu0 0
    %1980 = vmatpush1.bf16.msra.mxu0 0
    %1981 = vmatprep.subr.bf16.mxu0 0
    %1982 = vmatpush1.bf16.msra.mxu0 0
    %1983 = vmatprep.subr.bf16.mxu0 0
    %1984 = vmatpush1.bf16.msra.mxu0 0
    %1985 = vmatprep.subr.bf16.mxu0 0
    %1986 = vmatpush1.bf16.msra.mxu0 0
    %1987 = vmatprep.subr.bf16.mxu0 0
    %1988 = vmatpush1.bf16.msra.mxu0 0
    %1989 = vmatprep.subr.bf16.mxu0 0
    %1990 = vmatpush1.bf16.msra.mxu0 0
    %1991 = vmatprep.subr.bf16.mxu0 0
    %1992 = vmatpush1.bf16.msra.mxu0 0
    %1993 = vmatprep.subr.bf16.mxu0 0
    %1994 = vmatpush1.bf16.msra.mxu0 0
    %1995 = vmatprep.mubr.bf16.mxu0 0
    %1996 = vmatmul.mubr.bf16.gmra.mrb[0].mxu0 %v1814
    %v1997 = vpop.f32.mrb[0].mxu0
    %v1998 = vadd.f32 %v62, %v1997
    %v1999 = vpop.f32.mrb[0].mxu0
    %v2000 = vadd.f32 %v63, %v1999
    %v2001 = vpop.f32.mrb[0].mxu0
    %v2002 = vpop.f32.mrb[0].mxu0
    %2003 = vdwg.mxu0
    %2004 = vst [vmem:[#allocation8 + $0x40] sm:$0xff] %v1875
    %2005 = vst [vmem:[#allocation8 + $0x48] sm:$0xff] %v1877
    %2006 = vst [vmem:[#allocation8 + $0x50] sm:$0xff] %v1916
    %2007 = vst [vmem:[#allocation8 + $0x58] sm:$0xff] %v1918
    %2008 = vst [vmem:[#allocation8 + $0x60] sm:$0xff] %v1957
    %2009 = vst [vmem:[#allocation8 + $0x68] sm:$0xff] %v1959
    %2010 = vst [vmem:[#allocation8 + $0x70] sm:$0xff] %v1998
    %2011 = vst [vmem:[#allocation8 + $0x78] sm:$0xff] %v2000
    // Predicated region
    $region26: #{channel_wise_attention.1} parent=1 // pred_check
      _
    $region27: #{channel_wise_attention.1} parent=1 // pred_check_branch
      %2013 = sbr.rel (0) target = $region29
    $region28: #{channel_wise_attention.1} parent=1 // pred_region
      %s2015 = ssub.s32 2048, 2048
      %2016 = vsyncadd [#allocation5], %s2015
      %s2017 = sshll.u32 [#allocation8], 4
      %s2018 = int_to_ptr.vmem [resolvable:$true] %s2017
      %2023 = dma.vmem_to_hbm [thread:$0]  %s2018, 2048, %s4, [#allocation5], 1024, 1024, 64
    $region29: #{channel_wise_attention.1} parent=1 // pred_fallthru
      _
    // Predicated region
    $region30: #{channel_wise_attention.1} parent=1 // pred_check
      _
    $region31: #{channel_wise_attention.1} parent=1 // pred_check_branch
      %2025 = sbr.rel (0) target = $region33
    $region32: #{channel_wise_attention.1} parent=1 // pred_region
      %2026 = dma.done [#allocation5], 2048
    $region33: #{channel_wise_attention.1} parent=1 // pred_fallthru
      _
    %2027 = vsyncpa [#allocation4], 1
    %2028 = vsyncpa [#allocation7], 1
    %2029 = vsyncpa [#allocation5], 1

</llo_original>
